<compile_context>
chip_gen: v5e
topology: v5e:2x2
jax: 0.10.0
libtpu: 0.0.40
codegen_flags: <defaults>
</compile_context>

<pallas_src>
import functools

import numpy as np
import jax
import jax.numpy as jnp
from jax import lax
from jax.experimental import pallas as pl
from jax.experimental.pallas import tpu as pltpu


def _round_up(n, m):
    return -(-n // m) * m


# ---------------------------------------------------------------------------
# Fused Pallas kernel: one full NLayerDiscriminator stack + AvgPool1d downsample
# ---------------------------------------------------------------------------
def _fused_disc_kernel(*refs, meta, t_len, pool_t_out, batch):
    """refs layout (inputs, outputs, scratch):

    inputs : x_in       (B, C_in0, Tpad0)  f32  reflect-padded audio, lane dim 128-aligned
             pool_ph    (2, B, Tpool + 1)  f32  stride-phase split of zero-padded audio
             pool_scale (1, Tpool)         f32  1 / valid-count (count_include_pad=False)
             then per layer l: w_stack_l (C_out, K*C_in) bf16 ; bias_l (C_out, 1) f32
    outputs: out_ref    (B, 1, T)          f32  final conv output (squeezed in the wrapper)
             pooled_ref (B, Tpool)         f32  AvgPool1d of the raw audio (next scale's input)
    scratch: per layer l in 1..L-1: buf_l (B, C_in_l, Tbuf_l) f32 (zero-padded layer input)
    """
    n_layers = len(meta)
    x_ref = refs[0]
    pool_ph_ref = refs[1]
    pool_scale_ref = refs[2]
    wb_refs = refs[3:3 + 2 * n_layers]
    out_ref = refs[3 + 2 * n_layers]
    pooled_ref = refs[4 + 2 * n_layers]
    buf_refs = refs[5 + 2 * n_layers:]

    t = t_len

    # ---- fused AvgPool1d(4, stride=2, padding=1, count_include_pad=False) ----------------
    ph = pool_ph_ref[...]
    p0, p1 = ph[0], ph[1]                                   # (B, Tpool + 1) each
    tp = pool_t_out
    win_sum = p0[:, 0:tp] + p1[:, 0:tp] + p0[:, 1:tp + 1] + p1[:, 1:tp + 1]
    pooled_ref[...] = win_sum * pool_scale_ref[...]

    # ---- zero the padded inter-layer buffers (their pad columns must read as 0) ----------
    for buf in buf_refs:
        buf[...] = jnp.zeros(buf.shape, buf.dtype)

    # ---- conv stack: one deep-contraction MXU matmul per (layer, batch) ------------------
    cur = x_ref
    for l in range(n_layers):
        k_taps, _, apply_act = meta[l]
        w = wb_refs[2 * l][...]                             # (C_out, K*C_in) bf16
        bias = wb_refs[2 * l + 1][...]                      # (C_out, 1) f32
        last = (l == n_layers - 1)
        if not last:
            dst = buf_refs[l]
            dst_off = meta[l + 1][1]                        # next layer's zero padding
        for b in range(batch):
            # K shifted views of the padded input, stacked along the contraction axis.
            rhs = jnp.concatenate([cur[b, :, k:k + t] for k in range(k_taps)], axis=0)
            y = jnp.dot(w, rhs.astype(jnp.bfloat16),
                        preferred_element_type=jnp.float32)          # (C_out, T)
            y = y + bias
            if apply_act:
                y = jnp.where(y > 0.0, y, 0.2 * y)                    # LeakyReLU(0.2)
            if last:
                out_ref[b, :, :] = y
            else:
                dst[b, :, dst_off:dst_off + t] = y.astype(dst.dtype)
        if not last:
            cur = buf_refs[l]


# ---------------------------------------------------------------------------
# Wrapper: one fused pallas_call per NLayerDiscriminator (+ fused downsample)
# ---------------------------------------------------------------------------
def nlayer_discriminator_pallas(audio, layer_params):
    """audio: (B, T) f32.  Returns (disc_out (B, T), pooled_audio (B, T // 2))."""
    batch, t = audio.shape
    n_layers = len(layer_params)
    assert t % 2 == 0 and t >= 8

    for i, lp in enumerate(layer_params):
        assert lp["stride"] == 1, "fused path supports the stride-1 configuration"
        assert lp["kernel_size"] == 2 * lp["padding"] + 1
        assert i == 0 or lp["pad_mode"] == "zeros"

    # Layer-0 padding (reflect) applied once, wrapper side; lane dim rounded up to 128.
    p0 = layer_params[0]["padding"]
    mode0 = "reflect" if layer_params[0]["pad_mode"] == "reflect" else "constant"
    x_pad = jnp.pad(audio, ((0, 0), (p0, p0)), mode=mode0)
    t_in0 = t + 2 * p0
    t_in0_pad = _round_up(t_in0, 128)
    x_in = jnp.pad(x_pad, ((0, 0), (0, t_in0_pad - t_in0)))[:, None, :].astype(jnp.float32)

    # Phase-split input + reciprocal valid-counts for the fused AvgPool1d.
    t_pool = t // 2
    xz = jnp.pad(audio, ((0, 0), (1, 1)))                               # zero padding = 1
    pool_ph = xz.reshape(batch, t_pool + 1, 2).transpose(2, 0, 1).astype(jnp.float32)
    cnt = np.full((t_pool,), 4.0, np.float32)
    cnt[0] = 3.0
    cnt[-1] = 3.0
    pool_scale = jnp.asarray((1.0 / cnt).reshape(1, t_pool))

    args = [x_in, pool_ph, pool_scale]
    meta = []
    for lp in layer_params:
        args.append(lp["w_stack"].astype(jnp.bfloat16))
        args.append(lp["bias"].reshape(-1, 1).astype(jnp.float32))
        meta.append((lp["kernel_size"], lp["padding"], lp["apply_act"]))
    meta = tuple(meta)

    scratch = []
    for l in range(1, n_layers):
        c_in = layer_params[l]["w_dense"].shape[2]
        t_buf = _round_up(t + 2 * layer_params[l]["padding"], 128)
        scratch.append(pltpu.VMEM((batch, c_in, t_buf), jnp.float32))

    def _const_spec(arr):
        nd = arr.ndim
        return pl.BlockSpec(arr.shape, lambda *_: (0,) * nd)

    kernel = functools.partial(_fused_disc_kernel, meta=meta, t_len=t,
                               pool_t_out=t_pool, batch=batch)

    out, pooled = pl.pallas_call(
        kernel,
        out_shape=(jax.ShapeDtypeStruct((batch, 1, t), jnp.float32),
                   jax.ShapeDtypeStruct((batch, t_pool), jnp.float32)),
        grid=(1,),
        in_specs=[_const_spec(a) for a in args],
        out_specs=(pl.BlockSpec((batch, 1, t), lambda *_: (0, 0, 0)),
                   pl.BlockSpec((batch, t_pool), lambda *_: (0, 0))),
        scratch_shapes=scratch,
    )(*args)

    return out[:, 0, :], pooled


# ---------------------------------------------------------------------------
# Parameters: WNConv1d == weight_norm(Conv1d): effective weight w = g * v / ||v||
# ---------------------------------------------------------------------------
def _make_wnconv_params(key, c_in, c_out, kernel_size, stride, padding, groups,
                        pad_mode, apply_act):
    kv, kg, kb = jax.random.split(key, 3)
    v = 0.02 * jax.random.normal(kv, (c_out, c_in // groups, kernel_size), jnp.float32)
    g = 1.0 + 0.1 * jax.random.normal(kg, (c_out,), jnp.float32)
    b = 0.1 * jax.random.normal(kb, (c_out,), jnp.float32)

    norm = jnp.sqrt(jnp.sum(v * v, axis=(1, 2), keepdims=True))
    w_grouped = g.reshape(c_out, 1, 1) * v / norm            # torch (O, I/groups, K) layout

    # Expand groups into a dense block-diagonal (K, C_out, C_in) weight (fine at these small
    # channel counts; see TODO at the top for production-size grouped convs).
    c_out_pg, c_in_pg = c_out // groups, c_in // groups
    w_dense = jnp.zeros((kernel_size, c_out, c_in), jnp.float32)
    for gi in range(groups):
        blk = jnp.transpose(w_grouped[gi * c_out_pg:(gi + 1) * c_out_pg], (2, 0, 1))
        w_dense = w_dense.at[:, gi * c_out_pg:(gi + 1) * c_out_pg,
                             gi * c_in_pg:(gi + 1) * c_in_pg].set(blk)

    # Pre-stacked (C_out, K*C_in) weight: column index = k * C_in + c, matching the in-kernel
    # concatenation of the K shifted (C_in, T) slices along the contraction axis.
    w_stack = jnp.transpose(w_dense, (1, 0, 2)).reshape(c_out, kernel_size * c_in)

    return dict(w_grouped=w_grouped, w_dense=w_dense, w_stack=w_stack, bias=b,
                kernel_size=kernel_size, stride=stride, padding=padding,
                groups=groups, pad_mode=pad_mode, apply_act=apply_act)


def build_nlayer_discriminator_params(key, nsources, ndf, n_layers, downsampling_factor):
    """Mirrors NLayerDiscriminator.__init__ channel/kernel bookkeeping."""
    keys = iter(jax.random.split(key, n_layers + 3))
    layers = [_make_wnconv_params(next(keys), nsources, ndf, 15, 1, 7, 1, "reflect", True)]
    nf = ndf
    nf_prev = ndf
    stride = downsampling_factor
    for _ in range(1, n_layers + 1):
        nf_prev = nf
        nf = min(nf * stride, 1024)
        layers.append(_make_wnconv_params(next(keys), nf_prev, nf, stride * 10 + 1,
                                          stride, stride * 5, nf_prev // 4, "zeros", True))
    nf_out = min(nf * 2, 1024)
    # NOTE: the reference __init__ feeds nf_prev here; it equals the running channel count
    # only when stride == 1 (or nf hit the 1024 cap) — which is the config used below.
    layers.append(_make_wnconv_params(next(keys), nf_prev, nf_out, 5, 1, 2, 1, "zeros", True))
    layers.append(_make_wnconv_params(next(keys), nf_out, 1, 3, 1, 1, 1, "zeros", False))
    return layers


# ---------------------------------------------------------------------------
# Discriminator forward (Pallas) -- mirrors Discriminator.forward
# ---------------------------------------------------------------------------
def discriminator_forward_pallas(audio, spectrogram, disc_params):
    del spectrogram                      # unsqueezed but never consumed in the reference forward
    x = audio                            # (B, T); the channel dim of 1 is implicit
    results = []
    for layers in disc_params:
        res, pooled = nlayer_discriminator_pallas(x, layers)
        results.append(res)              # NLayerDiscriminator(x).squeeze(1)
        x = pooled                       # AvgPool1d(4, 2, 1) downsample between discriminators
    return results


# ---------------------------------------------------------------------------
# Independent pure-JAX reference (lax.conv path, same bf16 operand rounding)
# ---------------------------------------------------------------------------
def _conv1d_ref(x, lp):
    p = lp["padding"]
    mode = "reflect" if lp["pad_mode"] == "reflect" else "constant"
    xp = jnp.pad(x, ((0, 0), (0, 0), (p, p)), mode=mode)
    y = lax.conv_general_dilated(
        xp.astype(jnp.bfloat16), lp["w_grouped"].astype(jnp.bfloat16),
        window_strides=(lp["stride"],), padding="VALID",
        dimension_numbers=("NCH", "OIH", "NCH"),
        feature_group_count=lp["groups"],
        preferred_element_type=jnp.float32)
    y = y + lp["bias"].reshape(1, -1, 1)
    if lp["apply_act"]:
        y = jnp.where(y > 0.0, y, 0.2 * y)
    return y


def _avgpool_ref(x):
    B, C, T = x.shape
    T_out = (T + 2 - 4) // 2 + 1
    xp = jnp.pad(x, ((0, 0), (0, 0), (1, 1)))
    mask = jnp.pad(jnp.ones((1, 1, T), x.dtype), ((0, 0), (0, 0), (1, 1)))
    idx = 2 * jnp.arange(T_out)
    win = jnp.stack([xp[..., idx + k] for k in range(4)], axis=-1)
    cnt = jnp.stack([mask[..., idx + k] for k in range(4)], axis=-1)
    return win.sum(-1) / cnt.sum(-1)


def discriminator_forward_ref(audio, spectrogram, disc_params):
    del spectrogram
    x = audio[:, None, :]
    results = []
    for layers in disc_params:
        h = x
        for lp in layers:
            h = _conv1d_ref(h, lp)
        results.append(h[:, 0, :])
        x = _avgpool_ref(x)
    return results


# ---------------------------------------------------------------------------
if __name__ == "__main__":
    B, T = 2, 256
    NDISC = 2            # len(config.disc_audio_weights)
    NFILTERS = 8         # config.nfilters
    NLAYERS = 2          # config.naudio_disc_layers
    DOWNSAMPLING = 1     # config.audio_disc_downsampling_factor (keeps the reference
                         # __init__'s nf_prev channel bookkeeping self-consistent)

    key = jax.random.PRNGKey(0)
    k_audio, k_spec, k_params = jax.random.split(key, 3)
    audio = jax.random.normal(k_audio, (B, T), jnp.float32)
    spectrogram = jax.random.normal(k_spec, (B, 64), jnp.float32)   # unused by the forward

    disc_keys = jax.random.split(k_params, NDISC)
    disc_params = [
        build_nlayer_discriminator_params(disc_keys[i], 1, NFILTERS, NLAYERS, DOWNSAMPLING)
        for i in range(NDISC)
    ]

    outs = discriminator_forward_pallas(audio, spectrogram, disc_params)
    outs = jax.block_until_ready(outs)

    refs = discriminator_forward_ref(audio, spectrogram, disc_params)
    refs = jax.block_until_ready(refs)

    assert len(outs) == NDISC
    expected_t = [T, T // 2]
    for i, (o, r) in enumerate(zip(outs, refs)):
        assert o.shape == (B, expected_t[i]), (i, o.shape)
        # kernel: bf16 MXU operands + f32 accumulation; reference: lax.conv with the same
        # operand rounding -> only accumulation-order differences remain.
        np.testing.assert_allclose(np.asarray(o), np.asarray(r), rtol=1e-2, atol=1e-2)

    print("KERNEL_OK")
</pallas_src>

<mosaic_0001>
module attributes {stable_mosaic.version = 11 : i64} {
  func.func @_fused_disc_kernel(%arg0: i32, %arg1: memref<2x1x384xf32, #tpu.memory_space<vmem>>, %arg2: memref<2x2x129xf32, #tpu.memory_space<vmem>>, %arg3: memref<1x128xf32, #tpu.memory_space<vmem>>, %arg4: memref<8x15xbf16, #tpu.memory_space<vmem>>, %arg5: memref<8x1xf32, #tpu.memory_space<vmem>>, %arg6: memref<8x88xbf16, #tpu.memory_space<vmem>>, %arg7: memref<8x1xf32, #tpu.memory_space<vmem>>, %arg8: memref<8x88xbf16, #tpu.memory_space<vmem>>, %arg9: memref<8x1xf32, #tpu.memory_space<vmem>>, %arg10: memref<16x40xbf16, #tpu.memory_space<vmem>>, %arg11: memref<16x1xf32, #tpu.memory_space<vmem>>, %arg12: memref<1x48xbf16, #tpu.memory_space<vmem>>, %arg13: memref<1x1xf32, #tpu.memory_space<vmem>>, %arg14: memref<2x1x256xf32, #tpu.memory_space<vmem>>, %arg15: memref<2x128xf32, #tpu.memory_space<vmem>>, %arg16: memref<2x8x384xf32, #tpu.memory_space<vmem>>, %arg17: memref<2x8x384xf32, #tpu.memory_space<vmem>>, %arg18: memref<2x8x384xf32, #tpu.memory_space<vmem>>, %arg19: memref<2x16x384xf32, #tpu.memory_space<vmem>>) attributes {dimension_semantics = [#tpu.dimension_semantics<arbitrary>], iteration_bounds = array<i64: 1>, scalar_prefetch = 0 : i64, scratch_operands = 4 : i64, tpu.core_type = #tpu.core_type<tc>, window_params = [{pipeline_mode = #tpu.pipeline_mode<synchronous>, transform_indices = @transform_0, window_bounds = array<i64: 2, 1, 384>}, {pipeline_mode = #tpu.pipeline_mode<synchronous>, transform_indices = @transform_1, window_bounds = array<i64: 2, 2, 129>}, {pipeline_mode = #tpu.pipeline_mode<synchronous>, transform_indices = @transform_2, window_bounds = array<i64: 1, 128>}, {pipeline_mode = #tpu.pipeline_mode<synchronous>, transform_indices = @transform_3, window_bounds = array<i64: 8, 15>}, {pipeline_mode = #tpu.pipeline_mode<synchronous>, transform_indices = @transform_4, window_bounds = array<i64: 8, 1>}, {pipeline_mode = #tpu.pipeline_mode<synchronous>, transform_indices = @transform_5, window_bounds = array<i64: 8, 88>}, {pipeline_mode = #tpu.pipeline_mode<synchronous>, transform_indices = @transform_6, window_bounds = array<i64: 8, 1>}, {pipeline_mode = #tpu.pipeline_mode<synchronous>, transform_indices = @transform_7, window_bounds = array<i64: 8, 88>}, {pipeline_mode = #tpu.pipeline_mode<synchronous>, transform_indices = @transform_8, window_bounds = array<i64: 8, 1>}, {pipeline_mode = #tpu.pipeline_mode<synchronous>, transform_indices = @transform_9, window_bounds = array<i64: 16, 40>}, {pipeline_mode = #tpu.pipeline_mode<synchronous>, transform_indices = @transform_10, window_bounds = array<i64: 16, 1>}, {pipeline_mode = #tpu.pipeline_mode<synchronous>, transform_indices = @transform_11, window_bounds = array<i64: 1, 48>}, {pipeline_mode = #tpu.pipeline_mode<synchronous>, transform_indices = @transform_12, window_bounds = array<i64: 1, 1>}, {pipeline_mode = #tpu.pipeline_mode<synchronous>, transform_indices = @transform_13, window_bounds = array<i64: 2, 1, 256>}, {pipeline_mode = #tpu.pipeline_mode<synchronous>, transform_indices = @transform_14, window_bounds = array<i64: 2, 128>}]} {
    %c0 = arith.constant 0 : index
    %c0_0 = arith.constant 0 : index
    %c0_1 = arith.constant 0 : index
    %0 = vector.load %arg2[%c0, %c0_0, %c0_1] : memref<2x2x129xf32, #tpu.memory_space<vmem>>, vector<2x2x129xf32>
    %1 = vector.extract_strided_slice %0 {offsets = [0, 0, 0], sizes = [1, 2, 129], strides = [1, 1, 1]} : vector<2x2x129xf32> to vector<1x2x129xf32>
    %2 = vector.shape_cast %1 : vector<1x2x129xf32> to vector<2x129xf32>
    %3 = vector.extract_strided_slice %0 {offsets = [1, 0, 0], sizes = [1, 2, 129], strides = [1, 1, 1]} : vector<2x2x129xf32> to vector<1x2x129xf32>
    %4 = vector.shape_cast %3 : vector<1x2x129xf32> to vector<2x129xf32>
    %5 = vector.extract_strided_slice %2 {offsets = [0, 0], sizes = [2, 128], strides = [1, 1]} : vector<2x129xf32> to vector<2x128xf32>
    %6 = vector.extract_strided_slice %4 {offsets = [0, 0], sizes = [2, 128], strides = [1, 1]} : vector<2x129xf32> to vector<2x128xf32>
    %7 = arith.addf %5, %6 : vector<2x128xf32>
    %8 = vector.extract_strided_slice %2 {offsets = [0, 1], sizes = [2, 128], strides = [1, 1]} : vector<2x129xf32> to vector<2x128xf32>
    %9 = arith.addf %7, %8 : vector<2x128xf32>
    %10 = vector.extract_strided_slice %4 {offsets = [0, 1], sizes = [2, 128], strides = [1, 1]} : vector<2x129xf32> to vector<2x128xf32>
    %11 = arith.addf %9, %10 : vector<2x128xf32>
    %c0_2 = arith.constant 0 : index
    %c0_3 = arith.constant 0 : index
    %12 = vector.load %arg3[%c0_2, %c0_3] : memref<1x128xf32, #tpu.memory_space<vmem>>, vector<1x128xf32>
    %13 = vector.broadcast %12 : vector<1x128xf32> to vector<2x128xf32>
    %14 = arith.mulf %11, %13 : vector<2x128xf32>
    %c0_4 = arith.constant 0 : index
    %c0_5 = arith.constant 0 : index
    %15 = vector.load %arg15[%c0_4, %c0_5] : memref<2x128xf32, #tpu.memory_space<vmem>>, vector<2x128xf32>
    tpu.vector_store %arg15[%c0_4, %c0_5], %14 {strides = array<i32>} : memref<2x128xf32, #tpu.memory_space<vmem>>, vector<2x128xf32>,
    %cst = arith.constant 0.000000e+00 : f32
    %16 = vector.broadcast %cst : f32 to vector<2x8x384xf32>
    %c0_6 = arith.constant 0 : index
    %c0_7 = arith.constant 0 : index
    %c0_8 = arith.constant 0 : index
    %17 = vector.load %arg16[%c0_6, %c0_7, %c0_8] : memref<2x8x384xf32, #tpu.memory_space<vmem>>, vector<2x8x384xf32>
    tpu.vector_store %arg16[%c0_6, %c0_7, %c0_8], %16 {strides = array<i32>} : memref<2x8x384xf32, #tpu.memory_space<vmem>>, vector<2x8x384xf32>,
    %cst_9 = arith.constant 0.000000e+00 : f32
    %18 = vector.broadcast %cst_9 : f32 to vector<2x8x384xf32>
    %c0_10 = arith.constant 0 : index
    %c0_11 = arith.constant 0 : index
    %c0_12 = arith.constant 0 : index
    %19 = vector.load %arg17[%c0_10, %c0_11, %c0_12] : memref<2x8x384xf32, #tpu.memory_space<vmem>>, vector<2x8x384xf32>
    tpu.vector_store %arg17[%c0_10, %c0_11, %c0_12], %18 {strides = array<i32>} : memref<2x8x384xf32, #tpu.memory_space<vmem>>, vector<2x8x384xf32>,
    %cst_13 = arith.constant 0.000000e+00 : f32
    %20 = vector.broadcast %cst_13 : f32 to vector<2x8x384xf32>
    %c0_14 = arith.constant 0 : index
    %c0_15 = arith.constant 0 : index
    %c0_16 = arith.constant 0 : index
    %21 = vector.load %arg18[%c0_14, %c0_15, %c0_16] : memref<2x8x384xf32, #tpu.memory_space<vmem>>, vector<2x8x384xf32>
    tpu.vector_store %arg18[%c0_14, %c0_15, %c0_16], %20 {strides = array<i32>} : memref<2x8x384xf32, #tpu.memory_space<vmem>>, vector<2x8x384xf32>,
    %cst_17 = arith.constant 0.000000e+00 : f32
    %22 = vector.broadcast %cst_17 : f32 to vector<2x16x384xf32>
    %c0_18 = arith.constant 0 : index
    %c0_19 = arith.constant 0 : index
    %c0_20 = arith.constant 0 : index
    %23 = vector.load %arg19[%c0_18, %c0_19, %c0_20] : memref<2x16x384xf32, #tpu.memory_space<vmem>>, vector<2x16x384xf32>
    tpu.vector_store %arg19[%c0_18, %c0_19, %c0_20], %22 {strides = array<i32>} : memref<2x16x384xf32, #tpu.memory_space<vmem>>, vector<2x16x384xf32>,
    %c0_21 = arith.constant 0 : index
    %c0_22 = arith.constant 0 : index
    %24 = vector.load %arg4[%c0_21, %c0_22] : memref<8x15xbf16, #tpu.memory_space<vmem>>, vector<8x15xbf16>
    %c0_23 = arith.constant 0 : index
    %c0_24 = arith.constant 0 : index
    %25 = vector.load %arg5[%c0_23, %c0_24] : memref<8x1xf32, #tpu.memory_space<vmem>>, vector<8x1xf32>
    %c0_25 = arith.constant 0 : index
    %c0_26 = arith.constant 0 : index
    %c0_27 = arith.constant 0 : index
    %26 = vector.load %arg1[%c0_25, %c0_26, %c0_27] : memref<2x1x384xf32, #tpu.memory_space<vmem>>, vector<1x1x256xf32>
    %27 = vector.shape_cast %26 : vector<1x1x256xf32> to vector<1x256xf32>
    %c0_28 = arith.constant 0 : index
    %c0_29 = arith.constant 0 : index
    %c1 = arith.constant 1 : index
    %28 = vector.load %arg1[%c0_28, %c0_29, %c1] : memref<2x1x384xf32, #tpu.memory_space<vmem>>, vector<1x1x256xf32>
    %29 = vector.shape_cast %28 : vector<1x1x256xf32> to vector<1x256xf32>
    %c0_30 = arith.constant 0 : index
    %c0_31 = arith.constant 0 : index
    %c2 = arith.constant 2 : index
    %30 = vector.load %arg1[%c0_30, %c0_31, %c2] : memref<2x1x384xf32, #tpu.memory_space<vmem>>, vector<1x1x256xf32>
    %31 = vector.shape_cast %30 : vector<1x1x256xf32> to vector<1x256xf32>
    %c0_32 = arith.constant 0 : index
    %c0_33 = arith.constant 0 : index
    %c3 = arith.constant 3 : index
    %32 = vector.load %arg1[%c0_32, %c0_33, %c3] : memref<2x1x384xf32, #tpu.memory_space<vmem>>, vector<1x1x256xf32>
    %33 = vector.shape_cast %32 : vector<1x1x256xf32> to vector<1x256xf32>
    %c0_34 = arith.constant 0 : index
    %c0_35 = arith.constant 0 : index
    %c4 = arith.constant 4 : index
    %34 = vector.load %arg1[%c0_34, %c0_35, %c4] : memref<2x1x384xf32, #tpu.memory_space<vmem>>, vector<1x1x256xf32>
    %35 = vector.shape_cast %34 : vector<1x1x256xf32> to vector<1x256xf32>
    %c0_36 = arith.constant 0 : index
    %c0_37 = arith.constant 0 : index
    %c5 = arith.constant 5 : index
    %36 = vector.load %arg1[%c0_36, %c0_37, %c5] : memref<2x1x384xf32, #tpu.memory_space<vmem>>, vector<1x1x256xf32>
    %37 = vector.shape_cast %36 : vector<1x1x256xf32> to vector<1x256xf32>
    %c0_38 = arith.constant 0 : index
    %c0_39 = arith.constant 0 : index
    %c6 = arith.constant 6 : index
    %38 = vector.load %arg1[%c0_38, %c0_39, %c6] : memref<2x1x384xf32, #tpu.memory_space<vmem>>, vector<1x1x256xf32>
    %39 = vector.shape_cast %38 : vector<1x1x256xf32> to vector<1x256xf32>
    %c0_40 = arith.constant 0 : index
    %c0_41 = arith.constant 0 : index
    %c7 = arith.constant 7 : index
    %40 = vector.load %arg1[%c0_40, %c0_41, %c7] : memref<2x1x384xf32, #tpu.memory_space<vmem>>, vector<1x1x256xf32>
    %41 = vector.shape_cast %40 : vector<1x1x256xf32> to vector<1x256xf32>
    %c0_42 = arith.constant 0 : index
    %c0_43 = arith.constant 0 : index
    %c8 = arith.constant 8 : index
    %42 = vector.load %arg1[%c0_42, %c0_43, %c8] : memref<2x1x384xf32, #tpu.memory_space<vmem>>, vector<1x1x256xf32>
    %43 = vector.shape_cast %42 : vector<1x1x256xf32> to vector<1x256xf32>
    %c0_44 = arith.constant 0 : index
    %c0_45 = arith.constant 0 : index
    %c9 = arith.constant 9 : index
    %44 = vector.load %arg1[%c0_44, %c0_45, %c9] : memref<2x1x384xf32, #tpu.memory_space<vmem>>, vector<1x1x256xf32>
    %45 = vector.shape_cast %44 : vector<1x1x256xf32> to vector<1x256xf32>
    %c0_46 = arith.constant 0 : index
    %c0_47 = arith.constant 0 : index
    %c10 = arith.constant 10 : index
    %46 = vector.load %arg1[%c0_46, %c0_47, %c10] : memref<2x1x384xf32, #tpu.memory_space<vmem>>, vector<1x1x256xf32>
    %47 = vector.shape_cast %46 : vector<1x1x256xf32> to vector<1x256xf32>
    %c0_48 = arith.constant 0 : index
    %c0_49 = arith.constant 0 : index
    %c11 = arith.constant 11 : index
    %48 = vector.load %arg1[%c0_48, %c0_49, %c11] : memref<2x1x384xf32, #tpu.memory_space<vmem>>, vector<1x1x256xf32>
    %49 = vector.shape_cast %48 : vector<1x1x256xf32> to vector<1x256xf32>
    %c0_50 = arith.constant 0 : index
    %c0_51 = arith.constant 0 : index
    %c12 = arith.constant 12 : index
    %50 = vector.load %arg1[%c0_50, %c0_51, %c12] : memref<2x1x384xf32, #tpu.memory_space<vmem>>, vector<1x1x256xf32>
    %51 = vector.shape_cast %50 : vector<1x1x256xf32> to vector<1x256xf32>
    %c0_52 = arith.constant 0 : index
    %c0_53 = arith.constant 0 : index
    %c13 = arith.constant 13 : index
    %52 = vector.load %arg1[%c0_52, %c0_53, %c13] : memref<2x1x384xf32, #tpu.memory_space<vmem>>, vector<1x1x256xf32>
    %53 = vector.shape_cast %52 : vector<1x1x256xf32> to vector<1x256xf32>
    %c0_54 = arith.constant 0 : index
    %c0_55 = arith.constant 0 : index
    %c14 = arith.constant 14 : index
    %54 = vector.load %arg1[%c0_54, %c0_55, %c14] : memref<2x1x384xf32, #tpu.memory_space<vmem>>, vector<1x1x256xf32>
    %55 = vector.shape_cast %54 : vector<1x1x256xf32> to vector<1x256xf32>
    %56 = tpu.concatenate %27, %29, %31, %33, %35, %37, %39, %41, %43, %45, %47, %49, %51, %53, %55 in 0 : vector<1x256xf32>, vector<1x256xf32>, vector<1x256xf32>, vector<1x256xf32>, vector<1x256xf32>, vector<1x256xf32>, vector<1x256xf32>, vector<1x256xf32>, vector<1x256xf32>, vector<1x256xf32>, vector<1x256xf32>, vector<1x256xf32>, vector<1x256xf32>, vector<1x256xf32>, vector<1x256xf32> -> vector<15x256xf32>
    %57 = arith.truncf %56 : vector<15x256xf32> to vector<15x256xbf16>
    %cst_56 = arith.constant dense<0.000000e+00> : vector<8x256xf32>
    %58 = tpu.matmul %24, %57, %cst_56 {dimension_numbers = #tpu.dot_dimension_numbers<[1], [0], [0], [1], [0, 0, 1, 1], [], []>} : vector<8x15xbf16>, vector<15x256xbf16>, vector<8x256xf32> -> vector<8x256xf32>
    %59 = vector.broadcast %25 : vector<8x1xf32> to vector<8x256xf32>
    %60 = arith.addf %58, %59 : vector<8x256xf32>
    %cst_57 = arith.constant 0.000000e+00 : f32
    %61 = vector.broadcast %cst_57 : f32 to vector<8x256xf32>
    %62 = arith.cmpf ogt, %60, %61 : vector<8x256xf32>
    %cst_58 = arith.constant 2.000000e-01 : f32
    %63 = vector.broadcast %cst_58 : f32 to vector<8x256xf32>
    %64 = arith.mulf %63, %60 : vector<8x256xf32>
    %65 = arith.select %62, %60, %64 : vector<8x256xi1>, vector<8x256xf32>
    %c0_59 = arith.constant 0 : index
    %c0_60 = arith.constant 0 : index
    %c5_61 = arith.constant 5 : index
    %66 = vector.load %arg16[%c0_59, %c0_60, %c5_61] : memref<2x8x384xf32, #tpu.memory_space<vmem>>, vector<1x8x256xf32>
    %67 = vector.shape_cast %66 : vector<1x8x256xf32> to vector<8x256xf32>
    %68 = vector.shape_cast %65 : vector<8x256xf32> to vector<1x8x256xf32>
    tpu.vector_store %arg16[%c0_59, %c0_60, %c5_61], %68 {strides = array<i32>} : memref<2x8x384xf32, #tpu.memory_space<vmem>>, vector<1x8x256xf32>,
    %c1_62 = arith.constant 1 : index
    %c0_63 = arith.constant 0 : index
    %c0_64 = arith.constant 0 : index
    %69 = vector.load %arg1[%c1_62, %c0_63, %c0_64] : memref<2x1x384xf32, #tpu.memory_space<vmem>>, vector<1x1x256xf32>
    %70 = vector.shape_cast %69 : vector<1x1x256xf32> to vector<1x256xf32>
    %c1_65 = arith.constant 1 : index
    %c0_66 = arith.constant 0 : index
    %c1_67 = arith.constant 1 : index
    %71 = vector.load %arg1[%c1_65, %c0_66, %c1_67] : memref<2x1x384xf32, #tpu.memory_space<vmem>>, vector<1x1x256xf32>
    %72 = vector.shape_cast %71 : vector<1x1x256xf32> to vector<1x256xf32>
    %c1_68 = arith.constant 1 : index
    %c0_69 = arith.constant 0 : index
    %c2_70 = arith.constant 2 : index
    %73 = vector.load %arg1[%c1_68, %c0_69, %c2_70] : memref<2x1x384xf32, #tpu.memory_space<vmem>>, vector<1x1x256xf32>
    %74 = vector.shape_cast %73 : vector<1x1x256xf32> to vector<1x256xf32>
    %c1_71 = arith.constant 1 : index
    %c0_72 = arith.constant 0 : index
    %c3_73 = arith.constant 3 : index
    %75 = vector.load %arg1[%c1_71, %c0_72, %c3_73] : memref<2x1x384xf32, #tpu.memory_space<vmem>>, vector<1x1x256xf32>
    %76 = vector.shape_cast %75 : vector<1x1x256xf32> to vector<1x256xf32>
    %c1_74 = arith.constant 1 : index
    %c0_75 = arith.constant 0 : index
    %c4_76 = arith.constant 4 : index
    %77 = vector.load %arg1[%c1_74, %c0_75, %c4_76] : memref<2x1x384xf32, #tpu.memory_space<vmem>>, vector<1x1x256xf32>
    %78 = vector.shape_cast %77 : vector<1x1x256xf32> to vector<1x256xf32>
    %c1_77 = arith.constant 1 : index
    %c0_78 = arith.constant 0 : index
    %c5_79 = arith.constant 5 : index
    %79 = vector.load %arg1[%c1_77, %c0_78, %c5_79] : memref<2x1x384xf32, #tpu.memory_space<vmem>>, vector<1x1x256xf32>
    %80 = vector.shape_cast %79 : vector<1x1x256xf32> to vector<1x256xf32>
    %c1_80 = arith.constant 1 : index
    %c0_81 = arith.constant 0 : index
    %c6_82 = arith.constant 6 : index
    %81 = vector.load %arg1[%c1_80, %c0_81, %c6_82] : memref<2x1x384xf32, #tpu.memory_space<vmem>>, vector<1x1x256xf32>
    %82 = vector.shape_cast %81 : vector<1x1x256xf32> to vector<1x256xf32>
    %c1_83 = arith.constant 1 : index
    %c0_84 = arith.constant 0 : index
    %c7_85 = arith.constant 7 : index
    %83 = vector.load %arg1[%c1_83, %c0_84, %c7_85] : memref<2x1x384xf32, #tpu.memory_space<vmem>>, vector<1x1x256xf32>
    %84 = vector.shape_cast %83 : vector<1x1x256xf32> to vector<1x256xf32>
    %c1_86 = arith.constant 1 : index
    %c0_87 = arith.constant 0 : index
    %c8_88 = arith.constant 8 : index
    %85 = vector.load %arg1[%c1_86, %c0_87, %c8_88] : memref<2x1x384xf32, #tpu.memory_space<vmem>>, vector<1x1x256xf32>
    %86 = vector.shape_cast %85 : vector<1x1x256xf32> to vector<1x256xf32>
    %c1_89 = arith.constant 1 : index
    %c0_90 = arith.constant 0 : index
    %c9_91 = arith.constant 9 : index
    %87 = vector.load %arg1[%c1_89, %c0_90, %c9_91] : memref<2x1x384xf32, #tpu.memory_space<vmem>>, vector<1x1x256xf32>
    %88 = vector.shape_cast %87 : vector<1x1x256xf32> to vector<1x256xf32>
    %c1_92 = arith.constant 1 : index
    %c0_93 = arith.constant 0 : index
    %c10_94 = arith.constant 10 : index
    %89 = vector.load %arg1[%c1_92, %c0_93, %c10_94] : memref<2x1x384xf32, #tpu.memory_space<vmem>>, vector<1x1x256xf32>
    %90 = vector.shape_cast %89 : vector<1x1x256xf32> to vector<1x256xf32>
    %c1_95 = arith.constant 1 : index
    %c0_96 = arith.constant 0 : index
    %c11_97 = arith.constant 11 : index
    %91 = vector.load %arg1[%c1_95, %c0_96, %c11_97] : memref<2x1x384xf32, #tpu.memory_space<vmem>>, vector<1x1x256xf32>
    %92 = vector.shape_cast %91 : vector<1x1x256xf32> to vector<1x256xf32>
    %c1_98 = arith.constant 1 : index
    %c0_99 = arith.constant 0 : index
    %c12_100 = arith.constant 12 : index
    %93 = vector.load %arg1[%c1_98, %c0_99, %c12_100] : memref<2x1x384xf32, #tpu.memory_space<vmem>>, vector<1x1x256xf32>
    %94 = vector.shape_cast %93 : vector<1x1x256xf32> to vector<1x256xf32>
    %c1_101 = arith.constant 1 : index
    %c0_102 = arith.constant 0 : index
    %c13_103 = arith.constant 13 : index
    %95 = vector.load %arg1[%c1_101, %c0_102, %c13_103] : memref<2x1x384xf32, #tpu.memory_space<vmem>>, vector<1x1x256xf32>
    %96 = vector.shape_cast %95 : vector<1x1x256xf32> to vector<1x256xf32>
    %c1_104 = arith.constant 1 : index
    %c0_105 = arith.constant 0 : index
    %c14_106 = arith.constant 14 : index
    %97 = vector.load %arg1[%c1_104, %c0_105, %c14_106] : memref<2x1x384xf32, #tpu.memory_space<vmem>>, vector<1x1x256xf32>
    %98 = vector.shape_cast %97 : vector<1x1x256xf32> to vector<1x256xf32>
    %99 = tpu.concatenate %70, %72, %74, %76, %78, %80, %82, %84, %86, %88, %90, %92, %94, %96, %98 in 0 : vector<1x256xf32>, vector<1x256xf32>, vector<1x256xf32>, vector<1x256xf32>, vector<1x256xf32>, vector<1x256xf32>, vector<1x256xf32>, vector<1x256xf32>, vector<1x256xf32>, vector<1x256xf32>, vector<1x256xf32>, vector<1x256xf32>, vector<1x256xf32>, vector<1x256xf32>, vector<1x256xf32> -> vector<15x256xf32>
    %100 = arith.truncf %99 : vector<15x256xf32> to vector<15x256xbf16>
    %cst_107 = arith.constant dense<0.000000e+00> : vector<8x256xf32>
    %101 = tpu.matmul %24, %100, %cst_107 {dimension_numbers = #tpu.dot_dimension_numbers<[1], [0], [0], [1], [0, 0, 1, 1], [], []>} : vector<8x15xbf16>, vector<15x256xbf16>, vector<8x256xf32> -> vector<8x256xf32>
    %102 = vector.broadcast %25 : vector<8x1xf32> to vector<8x256xf32>
    %103 = arith.addf %101, %102 : vector<8x256xf32>
    %cst_108 = arith.constant 0.000000e+00 : f32
    %104 = vector.broadcast %cst_108 : f32 to vector<8x256xf32>
    %105 = arith.cmpf ogt, %103, %104 : vector<8x256xf32>
    %cst_109 = arith.constant 2.000000e-01 : f32
    %106 = vector.broadcast %cst_109 : f32 to vector<8x256xf32>
    %107 = arith.mulf %106, %103 : vector<8x256xf32>
    %108 = arith.select %105, %103, %107 : vector<8x256xi1>, vector<8x256xf32>
    %c1_110 = arith.constant 1 : index
    %c0_111 = arith.constant 0 : index
    %c5_112 = arith.constant 5 : index
    %109 = vector.load %arg16[%c1_110, %c0_111, %c5_112] : memref<2x8x384xf32, #tpu.memory_space<vmem>>, vector<1x8x256xf32>
    %110 = vector.shape_cast %109 : vector<1x8x256xf32> to vector<8x256xf32>
    %111 = vector.shape_cast %108 : vector<8x256xf32> to vector<1x8x256xf32>
    tpu.vector_store %arg16[%c1_110, %c0_111, %c5_112], %111 {strides = array<i32>} : memref<2x8x384xf32, #tpu.memory_space<vmem>>, vector<1x8x256xf32>,
    %c0_113 = arith.constant 0 : index
    %c0_114 = arith.constant 0 : index
    %112 = vector.load %arg6[%c0_113, %c0_114] : memref<8x88xbf16, #tpu.memory_space<vmem>>, vector<8x88xbf16>
    %c0_115 = arith.constant 0 : index
    %c0_116 = arith.constant 0 : index
    %113 = vector.load %arg7[%c0_115, %c0_116] : memref<8x1xf32, #tpu.memory_space<vmem>>, vector<8x1xf32>
    %c0_117 = arith.constant 0 : index
    %c0_118 = arith.constant 0 : index
    %c0_119 = arith.constant 0 : index
    %114 = vector.load %arg16[%c0_117, %c0_118, %c0_119] : memref<2x8x384xf32, #tpu.memory_space<vmem>>, vector<1x8x256xf32>
    %115 = vector.shape_cast %114 : vector<1x8x256xf32> to vector<8x256xf32>
    %c0_120 = arith.constant 0 : index
    %c0_121 = arith.constant 0 : index
    %c1_122 = arith.constant 1 : index
    %116 = vector.load %arg16[%c0_120, %c0_121, %c1_122] : memref<2x8x384xf32, #tpu.memory_space<vmem>>, vector<1x8x256xf32>
    %117 = vector.shape_cast %116 : vector<1x8x256xf32> to vector<8x256xf32>
    %c0_123 = arith.constant 0 : index
    %c0_124 = arith.constant 0 : index
    %c2_125 = arith.constant 2 : index
    %118 = vector.load %arg16[%c0_123, %c0_124, %c2_125] : memref<2x8x384xf32, #tpu.memory_space<vmem>>, vector<1x8x256xf32>
    %119 = vector.shape_cast %118 : vector<1x8x256xf32> to vector<8x256xf32>
    %c0_126 = arith.constant 0 : index
    %c0_127 = arith.constant 0 : index
    %c3_128 = arith.constant 3 : index
    %120 = vector.load %arg16[%c0_126, %c0_127, %c3_128] : memref<2x8x384xf32, #tpu.memory_space<vmem>>, vector<1x8x256xf32>
    %121 = vector.shape_cast %120 : vector<1x8x256xf32> to vector<8x256xf32>
    %c0_129 = arith.constant 0 : index
    %c0_130 = arith.constant 0 : index
    %c4_131 = arith.constant 4 : index
    %122 = vector.load %arg16[%c0_129, %c0_130, %c4_131] : memref<2x8x384xf32, #tpu.memory_space<vmem>>, vector<1x8x256xf32>
    %123 = vector.shape_cast %122 : vector<1x8x256xf32> to vector<8x256xf32>
    %c0_132 = arith.constant 0 : index
    %c0_133 = arith.constant 0 : index
    %c5_134 = arith.constant 5 : index
    %124 = vector.load %arg16[%c0_132, %c0_133, %c5_134] : memref<2x8x384xf32, #tpu.memory_space<vmem>>, vector<1x8x256xf32>
    %125 = vector.shape_cast %124 : vector<1x8x256xf32> to vector<8x256xf32>
    %c0_135 = arith.constant 0 : index
    %c0_136 = arith.constant 0 : index
    %c6_137 = arith.constant 6 : index
    %126 = vector.load %arg16[%c0_135, %c0_136, %c6_137] : memref<2x8x384xf32, #tpu.memory_space<vmem>>, vector<1x8x256xf32>
    %127 = vector.shape_cast %126 : vector<1x8x256xf32> to vector<8x256xf32>
    %c0_138 = arith.constant 0 : index
    %c0_139 = arith.constant 0 : index
    %c7_140 = arith.constant 7 : index
    %128 = vector.load %arg16[%c0_138, %c0_139, %c7_140] : memref<2x8x384xf32, #tpu.memory_space<vmem>>, vector<1x8x256xf32>
    %129 = vector.shape_cast %128 : vector<1x8x256xf32> to vector<8x256xf32>
    %c0_141 = arith.constant 0 : index
    %c0_142 = arith.constant 0 : index
    %c8_143 = arith.constant 8 : index
    %130 = vector.load %arg16[%c0_141, %c0_142, %c8_143] : memref<2x8x384xf32, #tpu.memory_space<vmem>>, vector<1x8x256xf32>
    %131 = vector.shape_cast %130 : vector<1x8x256xf32> to vector<8x256xf32>
    %c0_144 = arith.constant 0 : index
    %c0_145 = arith.constant 0 : index
    %c9_146 = arith.constant 9 : index
    %132 = vector.load %arg16[%c0_144, %c0_145, %c9_146] : memref<2x8x384xf32, #tpu.memory_space<vmem>>, vector<1x8x256xf32>
    %133 = vector.shape_cast %132 : vector<1x8x256xf32> to vector<8x256xf32>
    %c0_147 = arith.constant 0 : index
    %c0_148 = arith.constant 0 : index
    %c10_149 = arith.constant 10 : index
    %134 = vector.load %arg16[%c0_147, %c0_148, %c10_149] : memref<2x8x384xf32, #tpu.memory_space<vmem>>, vector<1x8x256xf32>
    %135 = vector.shape_cast %134 : vector<1x8x256xf32> to vector<8x256xf32>
    %136 = tpu.concatenate %115, %117, %119, %121, %123, %125, %127, %129, %131, %133, %135 in 0 : vector<8x256xf32>, vector<8x256xf32>, vector<8x256xf32>, vector<8x256xf32>, vector<8x256xf32>, vector<8x256xf32>, vector<8x256xf32>, vector<8x256xf32>, vector<8x256xf32>, vector<8x256xf32>, vector<8x256xf32> -> vector<88x256xf32>
    %137 = arith.truncf %136 : vector<88x256xf32> to vector<88x256xbf16>
    %cst_150 = arith.constant dense<0.000000e+00> : vector<8x256xf32>
    %138 = tpu.matmul %112, %137, %cst_150 {dimension_numbers = #tpu.dot_dimension_numbers<[1], [0], [0], [1], [0, 0, 1, 1], [], []>} : vector<8x88xbf16>, vector<88x256xbf16>, vector<8x256xf32> -> vector<8x256xf32>
    %139 = vector.broadcast %113 : vector<8x1xf32> to vector<8x256xf32>
    %140 = arith.addf %138, %139 : vector<8x256xf32>
    %cst_151 = arith.constant 0.000000e+00 : f32
    %141 = vector.broadcast %cst_151 : f32 to vector<8x256xf32>
    %142 = arith.cmpf ogt, %140, %141 : vector<8x256xf32>
    %cst_152 = arith.constant 2.000000e-01 : f32
    %143 = vector.broadcast %cst_152 : f32 to vector<8x256xf32>
    %144 = arith.mulf %143, %140 : vector<8x256xf32>
    %145 = arith.select %142, %140, %144 : vector<8x256xi1>, vector<8x256xf32>
    %c0_153 = arith.constant 0 : index
    %c0_154 = arith.constant 0 : index
    %c5_155 = arith.constant 5 : index
    %146 = vector.load %arg17[%c0_153, %c0_154, %c5_155] : memref<2x8x384xf32, #tpu.memory_space<vmem>>, vector<1x8x256xf32>
    %147 = vector.shape_cast %146 : vector<1x8x256xf32> to vector<8x256xf32>
    %148 = vector.shape_cast %145 : vector<8x256xf32> to vector<1x8x256xf32>
    tpu.vector_store %arg17[%c0_153, %c0_154, %c5_155], %148 {strides = array<i32>} : memref<2x8x384xf32, #tpu.memory_space<vmem>>, vector<1x8x256xf32>,
    %c1_156 = arith.constant 1 : index
    %c0_157 = arith.constant 0 : index
    %c0_158 = arith.constant 0 : index
    %149 = vector.load %arg16[%c1_156, %c0_157, %c0_158] : memref<2x8x384xf32, #tpu.memory_space<vmem>>, vector<1x8x256xf32>
    %150 = vector.shape_cast %149 : vector<1x8x256xf32> to vector<8x256xf32>
    %c1_159 = arith.constant 1 : index
    %c0_160 = arith.constant 0 : index
    %c1_161 = arith.constant 1 : index
    %151 = vector.load %arg16[%c1_159, %c0_160, %c1_161] : memref<2x8x384xf32, #tpu.memory_space<vmem>>, vector<1x8x256xf32>
    %152 = vector.shape_cast %151 : vector<1x8x256xf32> to vector<8x256xf32>
    %c1_162 = arith.constant 1 : index
    %c0_163 = arith.constant 0 : index
    %c2_164 = arith.constant 2 : index
    %153 = vector.load %arg16[%c1_162, %c0_163, %c2_164] : memref<2x8x384xf32, #tpu.memory_space<vmem>>, vector<1x8x256xf32>
    %154 = vector.shape_cast %153 : vector<1x8x256xf32> to vector<8x256xf32>
    %c1_165 = arith.constant 1 : index
    %c0_166 = arith.constant 0 : index
    %c3_167 = arith.constant 3 : index
    %155 = vector.load %arg16[%c1_165, %c0_166, %c3_167] : memref<2x8x384xf32, #tpu.memory_space<vmem>>, vector<1x8x256xf32>
    %156 = vector.shape_cast %155 : vector<1x8x256xf32> to vector<8x256xf32>
    %c1_168 = arith.constant 1 : index
    %c0_169 = arith.constant 0 : index
    %c4_170 = arith.constant 4 : index
    %157 = vector.load %arg16[%c1_168, %c0_169, %c4_170] : memref<2x8x384xf32, #tpu.memory_space<vmem>>, vector<1x8x256xf32>
    %158 = vector.shape_cast %157 : vector<1x8x256xf32> to vector<8x256xf32>
    %c1_171 = arith.constant 1 : index
    %c0_172 = arith.constant 0 : index
    %c5_173 = arith.constant 5 : index
    %159 = vector.load %arg16[%c1_171, %c0_172, %c5_173] : memref<2x8x384xf32, #tpu.memory_space<vmem>>, vector<1x8x256xf32>
    %160 = vector.shape_cast %159 : vector<1x8x256xf32> to vector<8x256xf32>
    %c1_174 = arith.constant 1 : index
    %c0_175 = arith.constant 0 : index
    %c6_176 = arith.constant 6 : index
    %161 = vector.load %arg16[%c1_174, %c0_175, %c6_176] : memref<2x8x384xf32, #tpu.memory_space<vmem>>, vector<1x8x256xf32>
    %162 = vector.shape_cast %161 : vector<1x8x256xf32> to vector<8x256xf32>
    %c1_177 = arith.constant 1 : index
    %c0_178 = arith.constant 0 : index
    %c7_179 = arith.constant 7 : index
    %163 = vector.load %arg16[%c1_177, %c0_178, %c7_179] : memref<2x8x384xf32, #tpu.memory_space<vmem>>, vector<1x8x256xf32>
    %164 = vector.shape_cast %163 : vector<1x8x256xf32> to vector<8x256xf32>
    %c1_180 = arith.constant 1 : index
    %c0_181 = arith.constant 0 : index
    %c8_182 = arith.constant 8 : index
    %165 = vector.load %arg16[%c1_180, %c0_181, %c8_182] : memref<2x8x384xf32, #tpu.memory_space<vmem>>, vector<1x8x256xf32>
    %166 = vector.shape_cast %165 : vector<1x8x256xf32> to vector<8x256xf32>
    %c1_183 = arith.constant 1 : index
    %c0_184 = arith.constant 0 : index
    %c9_185 = arith.constant 9 : index
    %167 = vector.load %arg16[%c1_183, %c0_184, %c9_185] : memref<2x8x384xf32, #tpu.memory_space<vmem>>, vector<1x8x256xf32>
    %168 = vector.shape_cast %167 : vector<1x8x256xf32> to vector<8x256xf32>
    %c1_186 = arith.constant 1 : index
    %c0_187 = arith.constant 0 : index
    %c10_188 = arith.constant 10 : index
    %169 = vector.load %arg16[%c1_186, %c0_187, %c10_188] : memref<2x8x384xf32, #tpu.memory_space<vmem>>, vector<1x8x256xf32>
    %170 = vector.shape_cast %169 : vector<1x8x256xf32> to vector<8x256xf32>
    %171 = tpu.concatenate %150, %152, %154, %156, %158, %160, %162, %164, %166, %168, %170 in 0 : vector<8x256xf32>, vector<8x256xf32>, vector<8x256xf32>, vector<8x256xf32>, vector<8x256xf32>, vector<8x256xf32>, vector<8x256xf32>, vector<8x256xf32>, vector<8x256xf32>, vector<8x256xf32>, vector<8x256xf32> -> vector<88x256xf32>
    %172 = arith.truncf %171 : vector<88x256xf32> to vector<88x256xbf16>
    %cst_189 = arith.constant dense<0.000000e+00> : vector<8x256xf32>
    %173 = tpu.matmul %112, %172, %cst_189 {dimension_numbers = #tpu.dot_dimension_numbers<[1], [0], [0], [1], [0, 0, 1, 1], [], []>} : vector<8x88xbf16>, vector<88x256xbf16>, vector<8x256xf32> -> vector<8x256xf32>
    %174 = vector.broadcast %113 : vector<8x1xf32> to vector<8x256xf32>
    %175 = arith.addf %173, %174 : vector<8x256xf32>
    %cst_190 = arith.constant 0.000000e+00 : f32
    %176 = vector.broadcast %cst_190 : f32 to vector<8x256xf32>
    %177 = arith.cmpf ogt, %175, %176 : vector<8x256xf32>
    %cst_191 = arith.constant 2.000000e-01 : f32
    %178 = vector.broadcast %cst_191 : f32 to vector<8x256xf32>
    %179 = arith.mulf %178, %175 : vector<8x256xf32>
    %180 = arith.select %177, %175, %179 : vector<8x256xi1>, vector<8x256xf32>
    %c1_192 = arith.constant 1 : index
    %c0_193 = arith.constant 0 : index
    %c5_194 = arith.constant 5 : index
    %181 = vector.load %arg17[%c1_192, %c0_193, %c5_194] : memref<2x8x384xf32, #tpu.memory_space<vmem>>, vector<1x8x256xf32>
    %182 = vector.shape_cast %181 : vector<1x8x256xf32> to vector<8x256xf32>
    %183 = vector.shape_cast %180 : vector<8x256xf32> to vector<1x8x256xf32>
    tpu.vector_store %arg17[%c1_192, %c0_193, %c5_194], %183 {strides = array<i32>} : memref<2x8x384xf32, #tpu.memory_space<vmem>>, vector<1x8x256xf32>,
    %c0_195 = arith.constant 0 : index
    %c0_196 = arith.constant 0 : index
    %184 = vector.load %arg8[%c0_195, %c0_196] : memref<8x88xbf16, #tpu.memory_space<vmem>>, vector<8x88xbf16>
    %c0_197 = arith.constant 0 : index
    %c0_198 = arith.constant 0 : index
    %185 = vector.load %arg9[%c0_197, %c0_198] : memref<8x1xf32, #tpu.memory_space<vmem>>, vector<8x1xf32>
    %c0_199 = arith.constant 0 : index
    %c0_200 = arith.constant 0 : index
    %c0_201 = arith.constant 0 : index
    %186 = vector.load %arg17[%c0_199, %c0_200, %c0_201] : memref<2x8x384xf32, #tpu.memory_space<vmem>>, vector<1x8x256xf32>
    %187 = vector.shape_cast %186 : vector<1x8x256xf32> to vector<8x256xf32>
    %c0_202 = arith.constant 0 : index
    %c0_203 = arith.constant 0 : index
    %c1_204 = arith.constant 1 : index
    %188 = vector.load %arg17[%c0_202, %c0_203, %c1_204] : memref<2x8x384xf32, #tpu.memory_space<vmem>>, vector<1x8x256xf32>
    %189 = vector.shape_cast %188 : vector<1x8x256xf32> to vector<8x256xf32>
    %c0_205 = arith.constant 0 : index
    %c0_206 = arith.constant 0 : index
    %c2_207 = arith.constant 2 : index
    %190 = vector.load %arg17[%c0_205, %c0_206, %c2_207] : memref<2x8x384xf32, #tpu.memory_space<vmem>>, vector<1x8x256xf32>
    %191 = vector.shape_cast %190 : vector<1x8x256xf32> to vector<8x256xf32>
    %c0_208 = arith.constant 0 : index
    %c0_209 = arith.constant 0 : index
    %c3_210 = arith.constant 3 : index
    %192 = vector.load %arg17[%c0_208, %c0_209, %c3_210] : memref<2x8x384xf32, #tpu.memory_space<vmem>>, vector<1x8x256xf32>
    %193 = vector.shape_cast %192 : vector<1x8x256xf32> to vector<8x256xf32>
    %c0_211 = arith.constant 0 : index
    %c0_212 = arith.constant 0 : index
    %c4_213 = arith.constant 4 : index
    %194 = vector.load %arg17[%c0_211, %c0_212, %c4_213] : memref<2x8x384xf32, #tpu.memory_space<vmem>>, vector<1x8x256xf32>
    %195 = vector.shape_cast %194 : vector<1x8x256xf32> to vector<8x256xf32>
    %c0_214 = arith.constant 0 : index
    %c0_215 = arith.constant 0 : index
    %c5_216 = arith.constant 5 : index
    %196 = vector.load %arg17[%c0_214, %c0_215, %c5_216] : memref<2x8x384xf32, #tpu.memory_space<vmem>>, vector<1x8x256xf32>
    %197 = vector.shape_cast %196 : vector<1x8x256xf32> to vector<8x256xf32>
    %c0_217 = arith.constant 0 : index
    %c0_218 = arith.constant 0 : index
    %c6_219 = arith.constant 6 : index
    %198 = vector.load %arg17[%c0_217, %c0_218, %c6_219] : memref<2x8x384xf32, #tpu.memory_space<vmem>>, vector<1x8x256xf32>
    %199 = vector.shape_cast %198 : vector<1x8x256xf32> to vector<8x256xf32>
    %c0_220 = arith.constant 0 : index
    %c0_221 = arith.constant 0 : index
    %c7_222 = arith.constant 7 : index
    %200 = vector.load %arg17[%c0_220, %c0_221, %c7_222] : memref<2x8x384xf32, #tpu.memory_space<vmem>>, vector<1x8x256xf32>
    %201 = vector.shape_cast %200 : vector<1x8x256xf32> to vector<8x256xf32>
    %c0_223 = arith.constant 0 : index
    %c0_224 = arith.constant 0 : index
    %c8_225 = arith.constant 8 : index
    %202 = vector.load %arg17[%c0_223, %c0_224, %c8_225] : memref<2x8x384xf32, #tpu.memory_space<vmem>>, vector<1x8x256xf32>
    %203 = vector.shape_cast %202 : vector<1x8x256xf32> to vector<8x256xf32>
    %c0_226 = arith.constant 0 : index
    %c0_227 = arith.constant 0 : index
    %c9_228 = arith.constant 9 : index
    %204 = vector.load %arg17[%c0_226, %c0_227, %c9_228] : memref<2x8x384xf32, #tpu.memory_space<vmem>>, vector<1x8x256xf32>
    %205 = vector.shape_cast %204 : vector<1x8x256xf32> to vector<8x256xf32>
    %c0_229 = arith.constant 0 : index
    %c0_230 = arith.constant 0 : index
    %c10_231 = arith.constant 10 : index
    %206 = vector.load %arg17[%c0_229, %c0_230, %c10_231] : memref<2x8x384xf32, #tpu.memory_space<vmem>>, vector<1x8x256xf32>
    %207 = vector.shape_cast %206 : vector<1x8x256xf32> to vector<8x256xf32>
    %208 = tpu.concatenate %187, %189, %191, %193, %195, %197, %199, %201, %203, %205, %207 in 0 : vector<8x256xf32>, vector<8x256xf32>, vector<8x256xf32>, vector<8x256xf32>, vector<8x256xf32>, vector<8x256xf32>, vector<8x256xf32>, vector<8x256xf32>, vector<8x256xf32>, vector<8x256xf32>, vector<8x256xf32> -> vector<88x256xf32>
    %209 = arith.truncf %208 : vector<88x256xf32> to vector<88x256xbf16>
    %cst_232 = arith.constant dense<0.000000e+00> : vector<8x256xf32>
    %210 = tpu.matmul %184, %209, %cst_232 {dimension_numbers = #tpu.dot_dimension_numbers<[1], [0], [0], [1], [0, 0, 1, 1], [], []>} : vector<8x88xbf16>, vector<88x256xbf16>, vector<8x256xf32> -> vector<8x256xf32>
    %211 = vector.broadcast %185 : vector<8x1xf32> to vector<8x256xf32>
    %212 = arith.addf %210, %211 : vector<8x256xf32>
    %cst_233 = arith.constant 0.000000e+00 : f32
    %213 = vector.broadcast %cst_233 : f32 to vector<8x256xf32>
    %214 = arith.cmpf ogt, %212, %213 : vector<8x256xf32>
    %cst_234 = arith.constant 2.000000e-01 : f32
    %215 = vector.broadcast %cst_234 : f32 to vector<8x256xf32>
    %216 = arith.mulf %215, %212 : vector<8x256xf32>
    %217 = arith.select %214, %212, %216 : vector<8x256xi1>, vector<8x256xf32>
    %c0_235 = arith.constant 0 : index
    %c0_236 = arith.constant 0 : index
    %c2_237 = arith.constant 2 : index
    %218 = vector.load %arg18[%c0_235, %c0_236, %c2_237] : memref<2x8x384xf32, #tpu.memory_space<vmem>>, vector<1x8x256xf32>
    %219 = vector.shape_cast %218 : vector<1x8x256xf32> to vector<8x256xf32>
    %220 = vector.shape_cast %217 : vector<8x256xf32> to vector<1x8x256xf32>
    tpu.vector_store %arg18[%c0_235, %c0_236, %c2_237], %220 {strides = array<i32>} : memref<2x8x384xf32, #tpu.memory_space<vmem>>, vector<1x8x256xf32>,
    %c1_238 = arith.constant 1 : index
    %c0_239 = arith.constant 0 : index
    %c0_240 = arith.constant 0 : index
    %221 = vector.load %arg17[%c1_238, %c0_239, %c0_240] : memref<2x8x384xf32, #tpu.memory_space<vmem>>, vector<1x8x256xf32>
    %222 = vector.shape_cast %221 : vector<1x8x256xf32> to vector<8x256xf32>
    %c1_241 = arith.constant 1 : index
    %c0_242 = arith.constant 0 : index
    %c1_243 = arith.constant 1 : index
    %223 = vector.load %arg17[%c1_241, %c0_242, %c1_243] : memref<2x8x384xf32, #tpu.memory_space<vmem>>, vector<1x8x256xf32>
    %224 = vector.shape_cast %223 : vector<1x8x256xf32> to vector<8x256xf32>
    %c1_244 = arith.constant 1 : index
    %c0_245 = arith.constant 0 : index
    %c2_246 = arith.constant 2 : index
    %225 = vector.load %arg17[%c1_244, %c0_245, %c2_246] : memref<2x8x384xf32, #tpu.memory_space<vmem>>, vector<1x8x256xf32>
    %226 = vector.shape_cast %225 : vector<1x8x256xf32> to vector<8x256xf32>
    %c1_247 = arith.constant 1 : index
    %c0_248 = arith.constant 0 : index
    %c3_249 = arith.constant 3 : index
    %227 = vector.load %arg17[%c1_247, %c0_248, %c3_249] : memref<2x8x384xf32, #tpu.memory_space<vmem>>, vector<1x8x256xf32>
    %228 = vector.shape_cast %227 : vector<1x8x256xf32> to vector<8x256xf32>
    %c1_250 = arith.constant 1 : index
    %c0_251 = arith.constant 0 : index
    %c4_252 = arith.constant 4 : index
    %229 = vector.load %arg17[%c1_250, %c0_251, %c4_252] : memref<2x8x384xf32, #tpu.memory_space<vmem>>, vector<1x8x256xf32>
    %230 = vector.shape_cast %229 : vector<1x8x256xf32> to vector<8x256xf32>
    %c1_253 = arith.constant 1 : index
    %c0_254 = arith.constant 0 : index
    %c5_255 = arith.constant 5 : index
    %231 = vector.load %arg17[%c1_253, %c0_254, %c5_255] : memref<2x8x384xf32, #tpu.memory_space<vmem>>, vector<1x8x256xf32>
    %232 = vector.shape_cast %231 : vector<1x8x256xf32> to vector<8x256xf32>
    %c1_256 = arith.constant 1 : index
    %c0_257 = arith.constant 0 : index
    %c6_258 = arith.constant 6 : index
    %233 = vector.load %arg17[%c1_256, %c0_257, %c6_258] : memref<2x8x384xf32, #tpu.memory_space<vmem>>, vector<1x8x256xf32>
    %234 = vector.shape_cast %233 : vector<1x8x256xf32> to vector<8x256xf32>
    %c1_259 = arith.constant 1 : index
    %c0_260 = arith.constant 0 : index
    %c7_261 = arith.constant 7 : index
    %235 = vector.load %arg17[%c1_259, %c0_260, %c7_261] : memref<2x8x384xf32, #tpu.memory_space<vmem>>, vector<1x8x256xf32>
    %236 = vector.shape_cast %235 : vector<1x8x256xf32> to vector<8x256xf32>
    %c1_262 = arith.constant 1 : index
    %c0_263 = arith.constant 0 : index
    %c8_264 = arith.constant 8 : index
    %237 = vector.load %arg17[%c1_262, %c0_263, %c8_264] : memref<2x8x384xf32, #tpu.memory_space<vmem>>, vector<1x8x256xf32>
    %238 = vector.shape_cast %237 : vector<1x8x256xf32> to vector<8x256xf32>
    %c1_265 = arith.constant 1 : index
    %c0_266 = arith.constant 0 : index
    %c9_267 = arith.constant 9 : index
    %239 = vector.load %arg17[%c1_265, %c0_266, %c9_267] : memref<2x8x384xf32, #tpu.memory_space<vmem>>, vector<1x8x256xf32>
    %240 = vector.shape_cast %239 : vector<1x8x256xf32> to vector<8x256xf32>
    %c1_268 = arith.constant 1 : index
    %c0_269 = arith.constant 0 : index
    %c10_270 = arith.constant 10 : index
    %241 = vector.load %arg17[%c1_268, %c0_269, %c10_270] : memref<2x8x384xf32, #tpu.memory_space<vmem>>, vector<1x8x256xf32>
    %242 = vector.shape_cast %241 : vector<1x8x256xf32> to vector<8x256xf32>
    %243 = tpu.concatenate %222, %224, %226, %228, %230, %232, %234, %236, %238, %240, %242 in 0 : vector<8x256xf32>, vector<8x256xf32>, vector<8x256xf32>, vector<8x256xf32>, vector<8x256xf32>, vector<8x256xf32>, vector<8x256xf32>, vector<8x256xf32>, vector<8x256xf32>, vector<8x256xf32>, vector<8x256xf32> -> vector<88x256xf32>
    %244 = arith.truncf %243 : vector<88x256xf32> to vector<88x256xbf16>
    %cst_271 = arith.constant dense<0.000000e+00> : vector<8x256xf32>
    %245 = tpu.matmul %184, %244, %cst_271 {dimension_numbers = #tpu.dot_dimension_numbers<[1], [0], [0], [1], [0, 0, 1, 1], [], []>} : vector<8x88xbf16>, vector<88x256xbf16>, vector<8x256xf32> -> vector<8x256xf32>
    %246 = vector.broadcast %185 : vector<8x1xf32> to vector<8x256xf32>
    %247 = arith.addf %245, %246 : vector<8x256xf32>
    %cst_272 = arith.constant 0.000000e+00 : f32
    %248 = vector.broadcast %cst_272 : f32 to vector<8x256xf32>
    %249 = arith.cmpf ogt, %247, %248 : vector<8x256xf32>
    %cst_273 = arith.constant 2.000000e-01 : f32
    %250 = vector.broadcast %cst_273 : f32 to vector<8x256xf32>
    %251 = arith.mulf %250, %247 : vector<8x256xf32>
    %252 = arith.select %249, %247, %251 : vector<8x256xi1>, vector<8x256xf32>
    %c1_274 = arith.constant 1 : index
    %c0_275 = arith.constant 0 : index
    %c2_276 = arith.constant 2 : index
    %253 = vector.load %arg18[%c1_274, %c0_275, %c2_276] : memref<2x8x384xf32, #tpu.memory_space<vmem>>, vector<1x8x256xf32>
    %254 = vector.shape_cast %253 : vector<1x8x256xf32> to vector<8x256xf32>
    %255 = vector.shape_cast %252 : vector<8x256xf32> to vector<1x8x256xf32>
    tpu.vector_store %arg18[%c1_274, %c0_275, %c2_276], %255 {strides = array<i32>} : memref<2x8x384xf32, #tpu.memory_space<vmem>>, vector<1x8x256xf32>,
    %c0_277 = arith.constant 0 : index
    %c0_278 = arith.constant 0 : index
    %256 = vector.load %arg10[%c0_277, %c0_278] : memref<16x40xbf16, #tpu.memory_space<vmem>>, vector<16x40xbf16>
    %c0_279 = arith.constant 0 : index
    %c0_280 = arith.constant 0 : index
    %257 = vector.load %arg11[%c0_279, %c0_280] : memref<16x1xf32, #tpu.memory_space<vmem>>, vector<16x1xf32>
    %c0_281 = arith.constant 0 : index
    %c0_282 = arith.constant 0 : index
    %c0_283 = arith.constant 0 : index
    %258 = vector.load %arg18[%c0_281, %c0_282, %c0_283] : memref<2x8x384xf32, #tpu.memory_space<vmem>>, vector<1x8x256xf32>
    %259 = vector.shape_cast %258 : vector<1x8x256xf32> to vector<8x256xf32>
    %c0_284 = arith.constant 0 : index
    %c0_285 = arith.constant 0 : index
    %c1_286 = arith.constant 1 : index
    %260 = vector.load %arg18[%c0_284, %c0_285, %c1_286] : memref<2x8x384xf32, #tpu.memory_space<vmem>>, vector<1x8x256xf32>
    %261 = vector.shape_cast %260 : vector<1x8x256xf32> to vector<8x256xf32>
    %c0_287 = arith.constant 0 : index
    %c0_288 = arith.constant 0 : index
    %c2_289 = arith.constant 2 : index
    %262 = vector.load %arg18[%c0_287, %c0_288, %c2_289] : memref<2x8x384xf32, #tpu.memory_space<vmem>>, vector<1x8x256xf32>
    %263 = vector.shape_cast %262 : vector<1x8x256xf32> to vector<8x256xf32>
    %c0_290 = arith.constant 0 : index
    %c0_291 = arith.constant 0 : index
    %c3_292 = arith.constant 3 : index
    %264 = vector.load %arg18[%c0_290, %c0_291, %c3_292] : memref<2x8x384xf32, #tpu.memory_space<vmem>>, vector<1x8x256xf32>
    %265 = vector.shape_cast %264 : vector<1x8x256xf32> to vector<8x256xf32>
    %c0_293 = arith.constant 0 : index
    %c0_294 = arith.constant 0 : index
    %c4_295 = arith.constant 4 : index
    %266 = vector.load %arg18[%c0_293, %c0_294, %c4_295] : memref<2x8x384xf32, #tpu.memory_space<vmem>>, vector<1x8x256xf32>
    %267 = vector.shape_cast %266 : vector<1x8x256xf32> to vector<8x256xf32>
    %268 = tpu.concatenate %259, %261, %263, %265, %267 in 0 : vector<8x256xf32>, vector<8x256xf32>, vector<8x256xf32>, vector<8x256xf32>, vector<8x256xf32> -> vector<40x256xf32>
    %269 = arith.truncf %268 : vector<40x256xf32> to vector<40x256xbf16>
    %cst_296 = arith.constant dense<0.000000e+00> : vector<16x256xf32>
    %270 = tpu.matmul %256, %269, %cst_296 {dimension_numbers = #tpu.dot_dimension_numbers<[1], [0], [0], [1], [0, 0, 1, 1], [], []>} : vector<16x40xbf16>, vector<40x256xbf16>, vector<16x256xf32> -> vector<16x256xf32>
    %271 = vector.broadcast %257 : vector<16x1xf32> to vector<16x256xf32>
    %272 = arith.addf %270, %271 : vector<16x256xf32>
    %cst_297 = arith.constant 0.000000e+00 : f32
    %273 = vector.broadcast %cst_297 : f32 to vector<16x256xf32>
    %274 = arith.cmpf ogt, %272, %273 : vector<16x256xf32>
    %cst_298 = arith.constant 2.000000e-01 : f32
    %275 = vector.broadcast %cst_298 : f32 to vector<16x256xf32>
    %276 = arith.mulf %275, %272 : vector<16x256xf32>
    %277 = arith.select %274, %272, %276 : vector<16x256xi1>, vector<16x256xf32>
    %c0_299 = arith.constant 0 : index
    %c0_300 = arith.constant 0 : index
    %c1_301 = arith.constant 1 : index
    %278 = vector.load %arg19[%c0_299, %c0_300, %c1_301] : memref<2x16x384xf32, #tpu.memory_space<vmem>>, vector<1x16x256xf32>
    %279 = vector.shape_cast %278 : vector<1x16x256xf32> to vector<16x256xf32>
    %280 = vector.shape_cast %277 : vector<16x256xf32> to vector<1x16x256xf32>
    tpu.vector_store %arg19[%c0_299, %c0_300, %c1_301], %280 {strides = array<i32>} : memref<2x16x384xf32, #tpu.memory_space<vmem>>, vector<1x16x256xf32>,
    %c1_302 = arith.constant 1 : index
    %c0_303 = arith.constant 0 : index
    %c0_304 = arith.constant 0 : index
    %281 = vector.load %arg18[%c1_302, %c0_303, %c0_304] : memref<2x8x384xf32, #tpu.memory_space<vmem>>, vector<1x8x256xf32>
    %282 = vector.shape_cast %281 : vector<1x8x256xf32> to vector<8x256xf32>
    %c1_305 = arith.constant 1 : index
    %c0_306 = arith.constant 0 : index
    %c1_307 = arith.constant 1 : index
    %283 = vector.load %arg18[%c1_305, %c0_306, %c1_307] : memref<2x8x384xf32, #tpu.memory_space<vmem>>, vector<1x8x256xf32>
    %284 = vector.shape_cast %283 : vector<1x8x256xf32> to vector<8x256xf32>
    %c1_308 = arith.constant 1 : index
    %c0_309 = arith.constant 0 : index
    %c2_310 = arith.constant 2 : index
    %285 = vector.load %arg18[%c1_308, %c0_309, %c2_310] : memref<2x8x384xf32, #tpu.memory_space<vmem>>, vector<1x8x256xf32>
    %286 = vector.shape_cast %285 : vector<1x8x256xf32> to vector<8x256xf32>
    %c1_311 = arith.constant 1 : index
    %c0_312 = arith.constant 0 : index
    %c3_313 = arith.constant 3 : index
    %287 = vector.load %arg18[%c1_311, %c0_312, %c3_313] : memref<2x8x384xf32, #tpu.memory_space<vmem>>, vector<1x8x256xf32>
    %288 = vector.shape_cast %287 : vector<1x8x256xf32> to vector<8x256xf32>
    %c1_314 = arith.constant 1 : index
    %c0_315 = arith.constant 0 : index
    %c4_316 = arith.constant 4 : index
    %289 = vector.load %arg18[%c1_314, %c0_315, %c4_316] : memref<2x8x384xf32, #tpu.memory_space<vmem>>, vector<1x8x256xf32>
    %290 = vector.shape_cast %289 : vector<1x8x256xf32> to vector<8x256xf32>
    %291 = tpu.concatenate %282, %284, %286, %288, %290 in 0 : vector<8x256xf32>, vector<8x256xf32>, vector<8x256xf32>, vector<8x256xf32>, vector<8x256xf32> -> vector<40x256xf32>
    %292 = arith.truncf %291 : vector<40x256xf32> to vector<40x256xbf16>
    %cst_317 = arith.constant dense<0.000000e+00> : vector<16x256xf32>
    %293 = tpu.matmul %256, %292, %cst_317 {dimension_numbers = #tpu.dot_dimension_numbers<[1], [0], [0], [1], [0, 0, 1, 1], [], []>} : vector<16x40xbf16>, vector<40x256xbf16>, vector<16x256xf32> -> vector<16x256xf32>
    %294 = vector.broadcast %257 : vector<16x1xf32> to vector<16x256xf32>
    %295 = arith.addf %293, %294 : vector<16x256xf32>
    %cst_318 = arith.constant 0.000000e+00 : f32
    %296 = vector.broadcast %cst_318 : f32 to vector<16x256xf32>
    %297 = arith.cmpf ogt, %295, %296 : vector<16x256xf32>
    %cst_319 = arith.constant 2.000000e-01 : f32
    %298 = vector.broadcast %cst_319 : f32 to vector<16x256xf32>
    %299 = arith.mulf %298, %295 : vector<16x256xf32>
    %300 = arith.select %297, %295, %299 : vector<16x256xi1>, vector<16x256xf32>
    %c1_320 = arith.constant 1 : index
    %c0_321 = arith.constant 0 : index
    %c1_322 = arith.constant 1 : index
    %301 = vector.load %arg19[%c1_320, %c0_321, %c1_322] : memref<2x16x384xf32, #tpu.memory_space<vmem>>, vector<1x16x256xf32>
    %302 = vector.shape_cast %301 : vector<1x16x256xf32> to vector<16x256xf32>
    %303 = vector.shape_cast %300 : vector<16x256xf32> to vector<1x16x256xf32>
    tpu.vector_store %arg19[%c1_320, %c0_321, %c1_322], %303 {strides = array<i32>} : memref<2x16x384xf32, #tpu.memory_space<vmem>>, vector<1x16x256xf32>,
    %c0_323 = arith.constant 0 : index
    %c0_324 = arith.constant 0 : index
    %304 = vector.load %arg12[%c0_323, %c0_324] : memref<1x48xbf16, #tpu.memory_space<vmem>>, vector<1x48xbf16>
    %c0_325 = arith.constant 0 : index
    %c0_326 = arith.constant 0 : index
    %305 = vector.load %arg13[%c0_325, %c0_326] : memref<1x1xf32, #tpu.memory_space<vmem>>, vector<1x1xf32>
    %c0_327 = arith.constant 0 : index
    %c0_328 = arith.constant 0 : index
    %c0_329 = arith.constant 0 : index
    %306 = vector.load %arg19[%c0_327, %c0_328, %c0_329] : memref<2x16x384xf32, #tpu.memory_space<vmem>>, vector<1x16x256xf32>
    %307 = vector.shape_cast %306 : vector<1x16x256xf32> to vector<16x256xf32>
    %c0_330 = arith.constant 0 : index
    %c0_331 = arith.constant 0 : index
    %c1_332 = arith.constant 1 : index
    %308 = vector.load %arg19[%c0_330, %c0_331, %c1_332] : memref<2x16x384xf32, #tpu.memory_space<vmem>>, vector<1x16x256xf32>
    %309 = vector.shape_cast %308 : vector<1x16x256xf32> to vector<16x256xf32>
    %c0_333 = arith.constant 0 : index
    %c0_334 = arith.constant 0 : index
    %c2_335 = arith.constant 2 : index
    %310 = vector.load %arg19[%c0_333, %c0_334, %c2_335] : memref<2x16x384xf32, #tpu.memory_space<vmem>>, vector<1x16x256xf32>
    %311 = vector.shape_cast %310 : vector<1x16x256xf32> to vector<16x256xf32>
    %312 = tpu.concatenate %307, %309, %311 in 0 : vector<16x256xf32>, vector<16x256xf32>, vector<16x256xf32> -> vector<48x256xf32>
    %313 = arith.truncf %312 : vector<48x256xf32> to vector<48x256xbf16>
    %cst_336 = arith.constant dense<0.000000e+00> : vector<1x256xf32>
    %314 = tpu.matmul %304, %313, %cst_336 {dimension_numbers = #tpu.dot_dimension_numbers<[1], [0], [0], [1], [0, 0, 1, 1], [], []>} : vector<1x48xbf16>, vector<48x256xbf16>, vector<1x256xf32> -> vector<1x256xf32>
    %315 = vector.broadcast %305 : vector<1x1xf32> to vector<1x256xf32>
    %316 = arith.addf %314, %315 : vector<1x256xf32>
    %c0_337 = arith.constant 0 : index
    %c0_338 = arith.constant 0 : index
    %c0_339 = arith.constant 0 : index
    %317 = vector.load %arg14[%c0_337, %c0_338, %c0_339] : memref<2x1x256xf32, #tpu.memory_space<vmem>>, vector<1x1x256xf32>
    %318 = vector.shape_cast %317 : vector<1x1x256xf32> to vector<1x256xf32>
    %319 = vector.shape_cast %316 : vector<1x256xf32> to vector<1x1x256xf32>
    tpu.vector_store %arg14[%c0_337, %c0_338, %c0_339], %319 {strides = array<i32>} : memref<2x1x256xf32, #tpu.memory_space<vmem>>, vector<1x1x256xf32>,
    %c1_340 = arith.constant 1 : index
    %c0_341 = arith.constant 0 : index
    %c0_342 = arith.constant 0 : index
    %320 = vector.load %arg19[%c1_340, %c0_341, %c0_342] : memref<2x16x384xf32, #tpu.memory_space<vmem>>, vector<1x16x256xf32>
    %321 = vector.shape_cast %320 : vector<1x16x256xf32> to vector<16x256xf32>
    %c1_343 = arith.constant 1 : index
    %c0_344 = arith.constant 0 : index
    %c1_345 = arith.constant 1 : index
    %322 = vector.load %arg19[%c1_343, %c0_344, %c1_345] : memref<2x16x384xf32, #tpu.memory_space<vmem>>, vector<1x16x256xf32>
    %323 = vector.shape_cast %322 : vector<1x16x256xf32> to vector<16x256xf32>
    %c1_346 = arith.constant 1 : index
    %c0_347 = arith.constant 0 : index
    %c2_348 = arith.constant 2 : index
    %324 = vector.load %arg19[%c1_346, %c0_347, %c2_348] : memref<2x16x384xf32, #tpu.memory_space<vmem>>, vector<1x16x256xf32>
    %325 = vector.shape_cast %324 : vector<1x16x256xf32> to vector<16x256xf32>
    %326 = tpu.concatenate %321, %323, %325 in 0 : vector<16x256xf32>, vector<16x256xf32>, vector<16x256xf32> -> vector<48x256xf32>
    %327 = arith.truncf %326 : vector<48x256xf32> to vector<48x256xbf16>
    %cst_349 = arith.constant dense<0.000000e+00> : vector<1x256xf32>
    %328 = tpu.matmul %304, %327, %cst_349 {dimension_numbers = #tpu.dot_dimension_numbers<[1], [0], [0], [1], [0, 0, 1, 1], [], []>} : vector<1x48xbf16>, vector<48x256xbf16>, vector<1x256xf32> -> vector<1x256xf32>
    %329 = vector.broadcast %305 : vector<1x1xf32> to vector<1x256xf32>
    %330 = arith.addf %328, %329 : vector<1x256xf32>
    %c1_350 = arith.constant 1 : index
    %c0_351 = arith.constant 0 : index
    %c0_352 = arith.constant 0 : index
    %331 = vector.load %arg14[%c1_350, %c0_351, %c0_352] : memref<2x1x256xf32, #tpu.memory_space<vmem>>, vector<1x1x256xf32>
    %332 = vector.shape_cast %331 : vector<1x1x256xf32> to vector<1x256xf32>
    %333 = vector.shape_cast %330 : vector<1x256xf32> to vector<1x1x256xf32>
    tpu.vector_store %arg14[%c1_350, %c0_351, %c0_352], %333 {strides = array<i32>} : memref<2x1x256xf32, #tpu.memory_space<vmem>>, vector<1x1x256xf32>,
    return
  }
  func.func @transform_0(%arg0: i32) -> (i32, i32, i32) {
    %c0_i32 = arith.constant 0 : i32
    %c0_i32_0 = arith.constant 0 : i32
    %c0_i32_1 = arith.constant 0 : i32
    %c0_i32_2 = arith.constant 0 : i32
    return %c0_i32, %c0_i32_0, %c0_i32_1 : i32, i32, i32
  }
  func.func @transform_1(%arg0: i32) -> (i32, i32, i32) {
    %c0_i32 = arith.constant 0 : i32
    %c0_i32_0 = arith.constant 0 : i32
    %c0_i32_1 = arith.constant 0 : i32
    %c0_i32_2 = arith.constant 0 : i32
    return %c0_i32, %c0_i32_0, %c0_i32_1 : i32, i32, i32
  }
  func.func @transform_2(%arg0: i32) -> (i32, i32) {
    %c0_i32 = arith.constant 0 : i32
    %c0_i32_0 = arith.constant 0 : i32
    %c0_i32_1 = arith.constant 0 : i32
    return %c0_i32, %c0_i32_0 : i32, i32
  }
  func.func @transform_3(%arg0: i32) -> (i32, i32) {
    %c0_i32 = arith.constant 0 : i32
    %c0_i32_0 = arith.constant 0 : i32
    %c0_i32_1 = arith.constant 0 : i32
    return %c0_i32, %c0_i32_0 : i32, i32
  }
  func.func @transform_4(%arg0: i32) -> (i32, i32) {
    %c0_i32 = arith.constant 0 : i32
    %c0_i32_0 = arith.constant 0 : i32
    %c0_i32_1 = arith.constant 0 : i32
    return %c0_i32, %c0_i32_0 : i32, i32
  }
  func.func @transform_5(%arg0: i32) -> (i32, i32) {
    %c0_i32 = arith.constant 0 : i32
    %c0_i32_0 = arith.constant 0 : i32
    %c0_i32_1 = arith.constant 0 : i32
    return %c0_i32, %c0_i32_0 : i32, i32
  }
  func.func @transform_6(%arg0: i32) -> (i32, i32) {
    %c0_i32 = arith.constant 0 : i32
    %c0_i32_0 = arith.constant 0 : i32
    %c0_i32_1 = arith.constant 0 : i32
    return %c0_i32, %c0_i32_0 : i32, i32
  }
  func.func @transform_7(%arg0: i32) -> (i32, i32) {
    %c0_i32 = arith.constant 0 : i32
    %c0_i32_0 = arith.constant 0 : i32
    %c0_i32_1 = arith.constant 0 : i32
    return %c0_i32, %c0_i32_0 : i32, i32
  }
  func.func @transform_8(%arg0: i32) -> (i32, i32) {
    %c0_i32 = arith.constant 0 : i32
    %c0_i32_0 = arith.constant 0 : i32
    %c0_i32_1 = arith.constant 0 : i32
    return %c0_i32, %c0_i32_0 : i32, i32
  }
  func.func @transform_9(%arg0: i32) -> (i32, i32) {
    %c0_i32 = arith.constant 0 : i32
    %c0_i32_0 = arith.constant 0 : i32
    %c0_i32_1 = arith.constant 0 : i32
    return %c0_i32, %c0_i32_0 : i32, i32
  }
  func.func @transform_10(%arg0: i32) -> (i32, i32) {
    %c0_i32 = arith.constant 0 : i32
    %c0_i32_0 = arith.constant 0 : i32
    %c0_i32_1 = arith.constant 0 : i32
    return %c0_i32, %c0_i32_0 : i32, i32
  }
  func.func @transform_11(%arg0: i32) -> (i32, i32) {
    %c0_i32 = arith.constant 0 : i32
    %c0_i32_0 = arith.constant 0 : i32
    %c0_i32_1 = arith.constant 0 : i32
    return %c0_i32, %c0_i32_0 : i32, i32
  }
  func.func @transform_12(%arg0: i32) -> (i32, i32) {
    %c0_i32 = arith.constant 0 : i32
    %c0_i32_0 = arith.constant 0 : i32
    %c0_i32_1 = arith.constant 0 : i32
    return %c0_i32, %c0_i32_0 : i32, i32
  }
  func.func @transform_13(%arg0: i32) -> (i32, i32, i32) {
    %c0_i32 = arith.constant 0 : i32
    %c0_i32_0 = arith.constant 0 : i32
    %c0_i32_1 = arith.constant 0 : i32
    %c0_i32_2 = arith.constant 0 : i32
    return %c0_i32, %c0_i32_0, %c0_i32_1 : i32, i32, i32
  }
  func.func @transform_14(%arg0: i32) -> (i32, i32) {
    %c0_i32 = arith.constant 0 : i32
    %c0_i32_0 = arith.constant 0 : i32
    %c0_i32_1 = arith.constant 0 : i32
    return %c0_i32, %c0_i32_0 : i32, i32
  }
}

</mosaic_0001>

<llo_original>
// kernel: tpu_custom_call.1
$region0: #{tpu_custom_call.1}
  #allocation0 [shape = 'u32[]', space=smem, size = 0x4, offset = 0x4, fixed_abs, tag = 'smem constant byte address 0x4 - core index']
  #allocation1 [shape = 'u32[72,128]{1,0:T(1,128)}', space=vmem, size = 0x9000, scoped, tag = 'internal scratch']
  #allocation2 [shape = 'f32[2,8,384]{2,1,0:T(8,128)}', space=vmem, size = 0x6000, scoped, tag = 'scratch operand']
  #allocation3 [shape = 'f32[2,8,384]{2,1,0:T(8,128)}', space=vmem, size = 0x6000, scoped, tag = 'scratch operand']
  #allocation4 [shape = 'f32[2,8,384]{2,1,0:T(8,128)}', space=vmem, size = 0x6000, scoped, tag = 'scratch operand']
  #allocation5 [shape = 'f32[2,16,384]{2,1,0:T(8,128)}', space=vmem, size = 0xc000, scoped, tag = 'scratch operand']
  #allocation6 [shape = 'f32[1,1]{1,0:T(1,128)S(1)}', space=vmem, size = 0x200, scoped, tag = 'scoped memory for tpu_custom_call.1']
  %s0 = inlined_call_operand.vmem [shape: f32[2,1,384], index: 0, kind: input, shape index: {}]
  %s1 = inlined_call_operand.vmem [shape: f32[2,2,129], index: 1, kind: input, shape index: {}]
  %s2 = inlined_call_operand.vmem [shape: f32[1,128], index: 2, kind: input, shape index: {}]
  %s3 = inlined_call_operand.vmem [shape: bf16[8,15], index: 3, kind: input, shape index: {}]
  %s4 = inlined_call_operand.vmem [shape: f32[8,1], index: 4, kind: input, shape index: {}]
  %s5 = inlined_call_operand.vmem [shape: bf16[8,88], index: 5, kind: input, shape index: {}]
  %s6 = inlined_call_operand.vmem [shape: f32[8,1], index: 6, kind: input, shape index: {}]
  %s7 = inlined_call_operand.vmem [shape: bf16[8,88], index: 7, kind: input, shape index: {}]
  %s8 = inlined_call_operand.vmem [shape: f32[8,1], index: 8, kind: input, shape index: {}]
  %s9 = inlined_call_operand.vmem [shape: bf16[16,40], index: 9, kind: input, shape index: {}]
  %s10 = inlined_call_operand.vmem [shape: f32[16,1], index: 10, kind: input, shape index: {}]
  %s11 = inlined_call_operand.vmem [shape: bf16[1,48], index: 11, kind: input, shape index: {}]
  %s12 = inlined_call_operand.<no memory space> [shape: f32[1,1], index: 12, kind: input, shape index: {}]
  %s13 = inlined_call_operand.hbm [shape: f32[2,1,256], index: 13, kind: output, shape index: {0}]
  %s14 = inlined_call_operand.hbm [shape: f32[2,128], index: 14, kind: output, shape index: {1}]
  %15 = xla_tuple %s13, %s14
  %s16 = sld [smem:[#allocation0]]
  $region70: #{tpu_custom_call.1} parent=0
    _
  %s18 = ssub.s32 1, %s16
  %s19 = scalar_select 0, %s18, %s16
  %v20 = vstv %s12
  %21 = vst [vmem:[#allocation6] sm:$0x1] %v20
  $region1: #{tpu_custom_call.1} parent=0
    #allocation7 [shape = 'u8[2048]{0}', space=vmem, size = 0x800, scoped, tag = 'output window, operand 0, single buffered']
    #allocation8 [shape = 's32[1]{0}', space=sflag, size = 0x4, scoped, tag = 'scoped memory for tpu_custom_call.1']
    #allocation9 [shape = 'u8[1024]{0}', space=vmem, size = 0x400, scoped, tag = 'output window, operand 1, single buffered']
    #allocation10 [shape = 's32[1]{0}', space=sflag, size = 0x4, scoped, tag = 'scoped memory for tpu_custom_call.1']
    %22 = vsyncpa [#allocation8], 0
    %23 = vsyncpa [#allocation10], 0
    // Predicated region
    $region2: #{tpu_custom_call.1} parent=1 // pred_check
      _
    $region3: #{tpu_custom_call.1} parent=1 // pred_check_branch
      %25 = sbr.rel (0) target = $region5
    $region4: #{tpu_custom_call.1} parent=1 // pred_region
      _
    $region5: #{tpu_custom_call.1} parent=1 // pred_fallthru
      _
    // Predicated region
    $region6: #{tpu_custom_call.1} parent=1 // pred_check
      _
    $region7: #{tpu_custom_call.1} parent=1 // pred_check_branch
      %27 = sbr.rel (0) target = $region9
    $region8: #{tpu_custom_call.1} parent=1 // pred_region
      _
    $region9: #{tpu_custom_call.1} parent=1 // pred_fallthru
      _
    // Predicated region
    $region10: #{tpu_custom_call.1} parent=1 // pred_check
      _
    $region11: #{tpu_custom_call.1} parent=1 // pred_check_branch
      %29 = sbr.rel (0) target = $region13
    $region12: #{tpu_custom_call.1} parent=1 // pred_region
      _
    $region13: #{tpu_custom_call.1} parent=1 // pred_fallthru
      _
    // Predicated region
    $region14: #{tpu_custom_call.1} parent=1 // pred_check
      _
    $region15: #{tpu_custom_call.1} parent=1 // pred_check_branch
      %31 = sbr.rel (0) target = $region17
    $region16: #{tpu_custom_call.1} parent=1 // pred_region
      _
    $region17: #{tpu_custom_call.1} parent=1 // pred_fallthru
      _
    // Predicated region
    $region18: #{tpu_custom_call.1} parent=1 // pred_check
      _
    $region19: #{tpu_custom_call.1} parent=1 // pred_check_branch
      %33 = sbr.rel (0) target = $region21
    $region20: #{tpu_custom_call.1} parent=1 // pred_region
      _
    $region21: #{tpu_custom_call.1} parent=1 // pred_fallthru
      _
    // Predicated region
    $region22: #{tpu_custom_call.1} parent=1 // pred_check
      _
    $region23: #{tpu_custom_call.1} parent=1 // pred_check_branch
      %35 = sbr.rel (0) target = $region25
    $region24: #{tpu_custom_call.1} parent=1 // pred_region
      _
    $region25: #{tpu_custom_call.1} parent=1 // pred_fallthru
      _
    // Predicated region
    $region26: #{tpu_custom_call.1} parent=1 // pred_check
      _
    $region27: #{tpu_custom_call.1} parent=1 // pred_check_branch
      %37 = sbr.rel (0) target = $region29
    $region28: #{tpu_custom_call.1} parent=1 // pred_region
      _
    $region29: #{tpu_custom_call.1} parent=1 // pred_fallthru
      _
    // Predicated region
    $region30: #{tpu_custom_call.1} parent=1 // pred_check
      _
    $region31: #{tpu_custom_call.1} parent=1 // pred_check_branch
      %39 = sbr.rel (0) target = $region33
    $region32: #{tpu_custom_call.1} parent=1 // pred_region
      _
    $region33: #{tpu_custom_call.1} parent=1 // pred_fallthru
      _
    // Predicated region
    $region34: #{tpu_custom_call.1} parent=1 // pred_check
      _
    $region35: #{tpu_custom_call.1} parent=1 // pred_check_branch
      %41 = sbr.rel (0) target = $region37
    $region36: #{tpu_custom_call.1} parent=1 // pred_region
      _
    $region37: #{tpu_custom_call.1} parent=1 // pred_fallthru
      _
    // Predicated region
    $region38: #{tpu_custom_call.1} parent=1 // pred_check
      _
    $region39: #{tpu_custom_call.1} parent=1 // pred_check_branch
      %43 = sbr.rel (0) target = $region41
    $region40: #{tpu_custom_call.1} parent=1 // pred_region
      _
    $region41: #{tpu_custom_call.1} parent=1 // pred_fallthru
      _
    // Predicated region
    $region42: #{tpu_custom_call.1} parent=1 // pred_check
      _
    $region43: #{tpu_custom_call.1} parent=1 // pred_check_branch
      %45 = sbr.rel (0) target = $region45
    $region44: #{tpu_custom_call.1} parent=1 // pred_region
      _
    $region45: #{tpu_custom_call.1} parent=1 // pred_fallthru
      _
    // Predicated region
    $region46: #{tpu_custom_call.1} parent=1 // pred_check
      _
    $region47: #{tpu_custom_call.1} parent=1 // pred_check_branch
      %47 = sbr.rel (0) target = $region49
    $region48: #{tpu_custom_call.1} parent=1 // pred_region
      _
    $region49: #{tpu_custom_call.1} parent=1 // pred_fallthru
      _
    // Predicated region
    $region50: #{tpu_custom_call.1} parent=1 // pred_check
      _
    $region51: #{tpu_custom_call.1} parent=1 // pred_check_branch
      %49 = sbr.rel (0) target = $region53
    $region52: #{tpu_custom_call.1} parent=1 // pred_region
      _
    $region53: #{tpu_custom_call.1} parent=1 // pred_fallthru
      _
    %v51 = vld [vmem:[%s1] sm:$0xf]
    %v52 = vld [vmem:[%s1 + $0x4] sm:$0xf]
    %v53 = vadd.f32 %v51, %v52
    %55 = vrot.lane.b32.xlu0 %v51, 127
    %v56 = vpop.permute.xlu0 %55
    %v57 = vrot.slane %v56, 2
    %vm58 = vcmask 1039360
    %v59 = vsel %vm58, %v56, %v57
    %v61 = vadd.f32 %v53, %v59
    %63 = vrot.lane.b32.xlu0 %v52, 127
    %v64 = vpop.permute.xlu0 %63
    %v65 = vrot.slane %v64, 2
    %v66 = vsel %vm58, %v64, %v65
    %v68 = vadd.f32 %v61, %v66
    %v69 = vld [vmem:[%s2] sm:$0x1]
    %v71 = vperm.slane %v69, 0
    %v73 = vmul.f32 %v68, %v71
    %74 = vst [vmem:[#allocation9] sm:$0x3] %v73
    %75 = vst [vmem:[#allocation2] sm:$0xff] 0.0
    %76 = vst [vmem:[#allocation2 + $0x8] sm:$0xff] 0.0
    %77 = vst [vmem:[#allocation2 + $0x10] sm:$0xff] 0.0
    %78 = vst [vmem:[#allocation2 + $0x18] sm:$0xff] 0.0
    %79 = vst [vmem:[#allocation2 + $0x20] sm:$0xff] 0.0
    %80 = vst [vmem:[#allocation2 + $0x28] sm:$0xff] 0.0
    %81 = vst [vmem:[#allocation3] sm:$0xff] 0.0
    %82 = vst [vmem:[#allocation3 + $0x8] sm:$0xff] 0.0
    %83 = vst [vmem:[#allocation3 + $0x10] sm:$0xff] 0.0
    %84 = vst [vmem:[#allocation3 + $0x18] sm:$0xff] 0.0
    %85 = vst [vmem:[#allocation3 + $0x20] sm:$0xff] 0.0
    %86 = vst [vmem:[#allocation3 + $0x28] sm:$0xff] 0.0
    %87 = vst [vmem:[#allocation4] sm:$0xff] 0.0
    %88 = vst [vmem:[#allocation4 + $0x8] sm:$0xff] 0.0
    %89 = vst [vmem:[#allocation4 + $0x10] sm:$0xff] 0.0
    %90 = vst [vmem:[#allocation4 + $0x18] sm:$0xff] 0.0
    %91 = vst [vmem:[#allocation4 + $0x20] sm:$0xff] 0.0
    %92 = vst [vmem:[#allocation4 + $0x28] sm:$0xff] 0.0
    %93 = vst [vmem:[#allocation5] sm:$0xff] 0.0
    %94 = vst [vmem:[#allocation5 + $0x8] sm:$0xff] 0.0
    %95 = vst [vmem:[#allocation5 + $0x10] sm:$0xff] 0.0
    %96 = vst [vmem:[#allocation5 + $0x18] sm:$0xff] 0.0
    %97 = vst [vmem:[#allocation5 + $0x20] sm:$0xff] 0.0
    %98 = vst [vmem:[#allocation5 + $0x28] sm:$0xff] 0.0
    %99 = vst [vmem:[#allocation5 + $0x30] sm:$0xff] 0.0
    %100 = vst [vmem:[#allocation5 + $0x38] sm:$0xff] 0.0
    %101 = vst [vmem:[#allocation5 + $0x40] sm:$0xff] 0.0
    %102 = vst [vmem:[#allocation5 + $0x48] sm:$0xff] 0.0
    %103 = vst [vmem:[#allocation5 + $0x50] sm:$0xff] 0.0
    %104 = vst [vmem:[#allocation5 + $0x58] sm:$0xff] 0.0
    %v105 = vld [vmem:[%s3] sm:$0xf]
    %v106 = vld [vmem:[%s4] sm:$0xff]
    %v107 = vld [vmem:[%s0] sm:$0x3]
    %v108 = vld [vmem:[%s0] sm:$0x7]
    %v110 = vperm.slane %v107, 0
    %v111 = vperm.slane %v107, 1
    %v115 = vperm.slane %v108, 0
    %v116 = vperm.slane %v108, 1
    %v117 = vperm.slane %v108, 2
    %118 = vrot.lane.b32.xlu0 %v115, 127
    %v119 = vpop.permute.xlu0 %118
    %120 = vrot.lane.b32.xlu0 %v116, 127
    %v121 = vpop.permute.xlu0 %120
    %122 = vrot.lane.b32.xlu0 %v117, 127
    %v123 = vpop.permute.xlu0 %122
    %v124 = vsel %vm58, %v119, %v121
    %v125 = vsel %vm58, %v121, %v123
    %128 = vrot.lane.b32.xlu0 %v115, 126
    %v129 = vpop.permute.xlu0 %128
    %130 = vrot.lane.b32.xlu0 %v116, 126
    %v131 = vpop.permute.xlu0 %130
    %132 = vrot.lane.b32.xlu0 %v117, 126
    %v133 = vpop.permute.xlu0 %132
    %vm134 = vcmask 1031168
    %v135 = vsel %vm134, %v129, %v131
    %v136 = vsel %vm134, %v131, %v133
    %139 = vrot.lane.b32.xlu0 %v115, 125
    %v140 = vpop.permute.xlu0 %139
    %141 = vrot.lane.b32.xlu0 %v116, 125
    %v142 = vpop.permute.xlu0 %141
    %143 = vrot.lane.b32.xlu0 %v117, 125
    %v144 = vpop.permute.xlu0 %143
    %vm145 = vcmask 1022976
    %v146 = vsel %vm145, %v140, %v142
    %v147 = vsel %vm145, %v142, %v144
    %150 = vrot.lane.b32.xlu0 %v115, 124
    %v151 = vpop.permute.xlu0 %150
    %152 = vrot.lane.b32.xlu0 %v116, 124
    %v153 = vpop.permute.xlu0 %152
    %154 = vrot.lane.b32.xlu0 %v117, 124
    %v155 = vpop.permute.xlu0 %154
    %vm156 = vcmask 1014784
    %v157 = vsel %vm156, %v151, %v153
    %v158 = vsel %vm156, %v153, %v155
    %161 = vrot.lane.b32.xlu0 %v115, 123
    %v162 = vpop.permute.xlu0 %161
    %163 = vrot.lane.b32.xlu0 %v116, 123
    %v164 = vpop.permute.xlu0 %163
    %165 = vrot.lane.b32.xlu0 %v117, 123
    %v166 = vpop.permute.xlu0 %165
    %vm167 = vcmask 1006592
    %v168 = vsel %vm167, %v162, %v164
    %v169 = vsel %vm167, %v164, %v166
    %172 = vrot.lane.b32.xlu0 %v115, 122
    %v173 = vpop.permute.xlu0 %172
    %174 = vrot.lane.b32.xlu0 %v116, 122
    %v175 = vpop.permute.xlu0 %174
    %176 = vrot.lane.b32.xlu0 %v117, 122
    %v177 = vpop.permute.xlu0 %176
    %vm178 = vcmask 998400
    %v179 = vsel %vm178, %v173, %v175
    %v180 = vsel %vm178, %v175, %v177
    %183 = vrot.lane.b32.xlu0 %v115, 121
    %v184 = vpop.permute.xlu0 %183
    %185 = vrot.lane.b32.xlu0 %v116, 121
    %v186 = vpop.permute.xlu0 %185
    %187 = vrot.lane.b32.xlu0 %v117, 121
    %v188 = vpop.permute.xlu0 %187
    %vm189 = vcmask 990208
    %v190 = vsel %vm189, %v184, %v186
    %v191 = vsel %vm189, %v186, %v188
    %194 = vrot.lane.b32.xlu0 %v115, 120
    %v195 = vpop.permute.xlu0 %194
    %196 = vrot.lane.b32.xlu0 %v116, 120
    %v197 = vpop.permute.xlu0 %196
    %198 = vrot.lane.b32.xlu0 %v117, 120
    %v199 = vpop.permute.xlu0 %198
    %vm200 = vcmask 982016
    %v201 = vsel %vm200, %v195, %v197
    %v202 = vsel %vm200, %v197, %v199
    %205 = vrot.lane.b32.xlu0 %v115, 119
    %v206 = vpop.permute.xlu0 %205
    %207 = vrot.lane.b32.xlu0 %v116, 119
    %v208 = vpop.permute.xlu0 %207
    %209 = vrot.lane.b32.xlu0 %v117, 119
    %v210 = vpop.permute.xlu0 %209
    %vm211 = vcmask 973824
    %v212 = vsel %vm211, %v206, %v208
    %v213 = vsel %vm211, %v208, %v210
    %216 = vrot.lane.b32.xlu0 %v115, 118
    %v217 = vpop.permute.xlu0 %216
    %218 = vrot.lane.b32.xlu0 %v116, 118
    %v219 = vpop.permute.xlu0 %218
    %220 = vrot.lane.b32.xlu0 %v117, 118
    %v221 = vpop.permute.xlu0 %220
    %vm222 = vcmask 965632
    %v223 = vsel %vm222, %v217, %v219
    %v224 = vsel %vm222, %v219, %v221
    %227 = vrot.lane.b32.xlu0 %v115, 117
    %v228 = vpop.permute.xlu0 %227
    %229 = vrot.lane.b32.xlu0 %v116, 117
    %v230 = vpop.permute.xlu0 %229
    %231 = vrot.lane.b32.xlu0 %v117, 117
    %v232 = vpop.permute.xlu0 %231
    %vm233 = vcmask 957440
    %v234 = vsel %vm233, %v228, %v230
    %v235 = vsel %vm233, %v230, %v232
    %238 = vrot.lane.b32.xlu0 %v115, 116
    %v239 = vpop.permute.xlu0 %238
    %240 = vrot.lane.b32.xlu0 %v116, 116
    %v241 = vpop.permute.xlu0 %240
    %242 = vrot.lane.b32.xlu0 %v117, 116
    %v243 = vpop.permute.xlu0 %242
    %vm244 = vcmask 949248
    %v245 = vsel %vm244, %v239, %v241
    %v246 = vsel %vm244, %v241, %v243
    %249 = vrot.lane.b32.xlu0 %v115, 115
    %v250 = vpop.permute.xlu0 %249
    %251 = vrot.lane.b32.xlu0 %v116, 115
    %v252 = vpop.permute.xlu0 %251
    %253 = vrot.lane.b32.xlu0 %v117, 115
    %v254 = vpop.permute.xlu0 %253
    %vm255 = vcmask 941056
    %v256 = vsel %vm255, %v250, %v252
    %v257 = vsel %vm255, %v252, %v254
    %260 = vrot.lane.b32.xlu0 %v115, 114
    %v261 = vpop.permute.xlu0 %260
    %262 = vrot.lane.b32.xlu0 %v116, 114
    %v263 = vpop.permute.xlu0 %262
    %264 = vrot.lane.b32.xlu0 %v117, 114
    %v265 = vpop.permute.xlu0 %264
    %vm266 = vcmask 932864
    %v267 = vsel %vm266, %v261, %v263
    %v268 = vsel %vm266, %v263, %v265
    %vm271 = vcmask 1040384
    %v272 = vsel %vm271, %v110, %v124
    %v273 = vsel %vm271, %v111, %v125
    %vm274 = vcmask 1041408
    %v275 = vsel %vm274, %v272, %v135
    %v276 = vsel %vm274, %v273, %v136
    %vm277 = vcmask 1042432
    %v278 = vsel %vm277, %v275, %v146
    %v279 = vsel %vm277, %v276, %v147
    %vm280 = vcmask 1043456
    %v281 = vsel %vm280, %v278, %v157
    %v282 = vsel %vm280, %v279, %v158
    %vm283 = vcmask 1044480
    %v284 = vsel %vm283, %v281, %v168
    %v285 = vsel %vm283, %v282, %v169
    %vm286 = vcmask 1045504
    %v287 = vsel %vm286, %v284, %v179
    %v288 = vsel %vm286, %v285, %v180
    %vm289 = vcmask 1046528
    %v290 = vsel %vm289, %v287, %v190
    %v291 = vsel %vm289, %v288, %v191
    %v292 = vsel %vm271, %v201, %v212
    %v293 = vsel %vm271, %v202, %v213
    %v294 = vsel %vm274, %v292, %v223
    %v295 = vsel %vm274, %v293, %v224
    %v296 = vsel %vm277, %v294, %v234
    %v297 = vsel %vm277, %v295, %v235
    %v298 = vsel %vm280, %v296, %v245
    %v299 = vsel %vm280, %v297, %v246
    %v300 = vsel %vm283, %v298, %v256
    %v301 = vsel %vm283, %v299, %v257
    %v302 = vsel %vm286, %v300, %v267
    %v303 = vsel %vm286, %v301, %v268
    %v304 = vpack.c.bf16 %v302, %v290
    %v305 = vpack.c.bf16 %v303, %v291
    %307 = vset.pattern.permute.xlu0 0
    %308 = vperm.xlu0 %307, %v106
    %v309 = vpop.permute.xlu0 %308
    %vm311 = vcmask 121856
    %v313 = vsel %vm311, %v105, 0
    %vm315 = vcmask 1047552
    %v316 = vsel %vm289, 4294967295, 65535
    %v317 = vsel %vm315, %v316, 0
    %v319 = vand.u32 %v304, %v317
    %v322 = vand.u32 %v305, %v317
    %324 = vmatpush.bf16.msra.mxu0 0
    %325 = vmatpush.bf16.msra.mxu0 0
    %326 = vmatpush.bf16.msra.mxu0 0
    %327 = vmatpush.bf16.msra.mxu0 0
    %328 = vmatpush.bf16.msra.mxu0 0
    %329 = vmatpush.bf16.msra.mxu0 0
    %330 = vmatpush.bf16.msra.mxu0 0
    %331 = vmatpush.bf16.msra.mxu0 %v319
    %332 = vmatmul.bf16.gmra.mxu0 %v313
    %v333 = vpop.f32.mrf.mxu0
    %v334 = vadd.f32 %v309, %v333
    %v335 = vpop.f32.mrf.mxu0
    %336 = vdwg.mxu0
    %337 = vmatpush.bf16.msra.mxu0 0
    %338 = vmatpush.bf16.msra.mxu0 0
    %339 = vmatpush.bf16.msra.mxu0 0
    %340 = vmatpush.bf16.msra.mxu0 0
    %341 = vmatpush.bf16.msra.mxu0 0
    %342 = vmatpush.bf16.msra.mxu0 0
    %343 = vmatpush.bf16.msra.mxu0 0
    %344 = vmatpush.bf16.msra.mxu0 %v322
    %345 = vmatmul.bf16.gmra.mxu0 %v313
    %v346 = vpop.f32.mrf.mxu0
    %v347 = vadd.f32 %v309, %v346
    %v348 = vpop.f32.mrf.mxu0
    %349 = vdwg.mxu0
    %vm350 = vcmp.gt.f32.partialorder %v334, 0.0
    %vm351 = vcmp.gt.f32.partialorder %v347, 0.0
    %v352 = vmul.f32 %v334, 0.2
    %v353 = vmul.f32 %v347, 0.2
    %v354 = vsel %vm350, %v334, %v352
    %v355 = vsel %vm351, %v347, %v353
    %358 = vrot.lane.b32.xlu0 %v354, 5
    %v359 = vpop.permute.xlu0 %358
    %360 = vrot.lane.b32.xlu0 %v355, 5
    %v361 = vpop.permute.xlu0 %360
    %vm362 = vcmask 39936
    %v363 = vsel %vm362, %v359, %v361
    %vm367 = vcmask 1047592
    %368 = vst.msk [vmem:[#allocation2] sm:$0xff] %vm367, %v359
    %369 = vst [vmem:[#allocation2 + $0x8] sm:$0xff] %v363
    %370 = vst.msk [vmem:[#allocation2 + $0x10] sm:$0xff] %vm362, %v361
    %s371 = scalar_lea.vmem %s0, 3
    %v372 = vld [vmem:[%s371] sm:$0x3]
    %v373 = vld [vmem:[%s371] sm:$0x7]
    %v375 = vperm.slane %v372, 0
    %v376 = vperm.slane %v372, 1
    %v380 = vperm.slane %v373, 0
    %v381 = vperm.slane %v373, 1
    %v382 = vperm.slane %v373, 2
    %383 = vrot.lane.b32.xlu0 %v380, 127
    %v384 = vpop.permute.xlu0 %383
    %385 = vrot.lane.b32.xlu0 %v381, 127
    %v386 = vpop.permute.xlu0 %385
    %387 = vrot.lane.b32.xlu0 %v382, 127
    %v388 = vpop.permute.xlu0 %387
    %v389 = vsel %vm58, %v384, %v386
    %v390 = vsel %vm58, %v386, %v388
    %393 = vrot.lane.b32.xlu0 %v380, 126
    %v394 = vpop.permute.xlu0 %393
    %395 = vrot.lane.b32.xlu0 %v381, 126
    %v396 = vpop.permute.xlu0 %395
    %397 = vrot.lane.b32.xlu0 %v382, 126
    %v398 = vpop.permute.xlu0 %397
    %v399 = vsel %vm134, %v394, %v396
    %v400 = vsel %vm134, %v396, %v398
    %403 = vrot.lane.b32.xlu0 %v380, 125
    %v404 = vpop.permute.xlu0 %403
    %405 = vrot.lane.b32.xlu0 %v381, 125
    %v406 = vpop.permute.xlu0 %405
    %407 = vrot.lane.b32.xlu0 %v382, 125
    %v408 = vpop.permute.xlu0 %407
    %v409 = vsel %vm145, %v404, %v406
    %v410 = vsel %vm145, %v406, %v408
    %413 = vrot.lane.b32.xlu0 %v380, 124
    %v414 = vpop.permute.xlu0 %413
    %415 = vrot.lane.b32.xlu0 %v381, 124
    %v416 = vpop.permute.xlu0 %415
    %417 = vrot.lane.b32.xlu0 %v382, 124
    %v418 = vpop.permute.xlu0 %417
    %v419 = vsel %vm156, %v414, %v416
    %v420 = vsel %vm156, %v416, %v418
    %423 = vrot.lane.b32.xlu0 %v380, 123
    %v424 = vpop.permute.xlu0 %423
    %425 = vrot.lane.b32.xlu0 %v381, 123
    %v426 = vpop.permute.xlu0 %425
    %427 = vrot.lane.b32.xlu0 %v382, 123
    %v428 = vpop.permute.xlu0 %427
    %v429 = vsel %vm167, %v424, %v426
    %v430 = vsel %vm167, %v426, %v428
    %433 = vrot.lane.b32.xlu0 %v380, 122
    %v434 = vpop.permute.xlu0 %433
    %435 = vrot.lane.b32.xlu0 %v381, 122
    %v436 = vpop.permute.xlu0 %435
    %437 = vrot.lane.b32.xlu0 %v382, 122
    %v438 = vpop.permute.xlu0 %437
    %v439 = vsel %vm178, %v434, %v436
    %v440 = vsel %vm178, %v436, %v438
    %443 = vrot.lane.b32.xlu0 %v380, 121
    %v444 = vpop.permute.xlu0 %443
    %445 = vrot.lane.b32.xlu0 %v381, 121
    %v446 = vpop.permute.xlu0 %445
    %447 = vrot.lane.b32.xlu0 %v382, 121
    %v448 = vpop.permute.xlu0 %447
    %v449 = vsel %vm189, %v444, %v446
    %v450 = vsel %vm189, %v446, %v448
    %453 = vrot.lane.b32.xlu0 %v380, 120
    %v454 = vpop.permute.xlu0 %453
    %455 = vrot.lane.b32.xlu0 %v381, 120
    %v456 = vpop.permute.xlu0 %455
    %457 = vrot.lane.b32.xlu0 %v382, 120
    %v458 = vpop.permute.xlu0 %457
    %v459 = vsel %vm200, %v454, %v456
    %v460 = vsel %vm200, %v456, %v458
    %463 = vrot.lane.b32.xlu0 %v380, 119
    %v464 = vpop.permute.xlu0 %463
    %465 = vrot.lane.b32.xlu0 %v381, 119
    %v466 = vpop.permute.xlu0 %465
    %467 = vrot.lane.b32.xlu0 %v382, 119
    %v468 = vpop.permute.xlu0 %467
    %v469 = vsel %vm211, %v464, %v466
    %v470 = vsel %vm211, %v466, %v468
    %473 = vrot.lane.b32.xlu0 %v380, 118
    %v474 = vpop.permute.xlu0 %473
    %475 = vrot.lane.b32.xlu0 %v381, 118
    %v476 = vpop.permute.xlu0 %475
    %477 = vrot.lane.b32.xlu0 %v382, 118
    %v478 = vpop.permute.xlu0 %477
    %v479 = vsel %vm222, %v474, %v476
    %v480 = vsel %vm222, %v476, %v478
    %483 = vrot.lane.b32.xlu0 %v380, 117
    %v484 = vpop.permute.xlu0 %483
    %485 = vrot.lane.b32.xlu0 %v381, 117
    %v486 = vpop.permute.xlu0 %485
    %487 = vrot.lane.b32.xlu0 %v382, 117
    %v488 = vpop.permute.xlu0 %487
    %v489 = vsel %vm233, %v484, %v486
    %v490 = vsel %vm233, %v486, %v488
    %493 = vrot.lane.b32.xlu0 %v380, 116
    %v494 = vpop.permute.xlu0 %493
    %495 = vrot.lane.b32.xlu0 %v381, 116
    %v496 = vpop.permute.xlu0 %495
    %497 = vrot.lane.b32.xlu0 %v382, 116
    %v498 = vpop.permute.xlu0 %497
    %v499 = vsel %vm244, %v494, %v496
    %v500 = vsel %vm244, %v496, %v498
    %503 = vrot.lane.b32.xlu0 %v380, 115
    %v504 = vpop.permute.xlu0 %503
    %505 = vrot.lane.b32.xlu0 %v381, 115
    %v506 = vpop.permute.xlu0 %505
    %507 = vrot.lane.b32.xlu0 %v382, 115
    %v508 = vpop.permute.xlu0 %507
    %v509 = vsel %vm255, %v504, %v506
    %v510 = vsel %vm255, %v506, %v508
    %513 = vrot.lane.b32.xlu0 %v380, 114
    %v514 = vpop.permute.xlu0 %513
    %515 = vrot.lane.b32.xlu0 %v381, 114
    %v516 = vpop.permute.xlu0 %515
    %517 = vrot.lane.b32.xlu0 %v382, 114
    %v518 = vpop.permute.xlu0 %517
    %v519 = vsel %vm266, %v514, %v516
    %v520 = vsel %vm266, %v516, %v518
    %v523 = vsel %vm271, %v375, %v389
    %v524 = vsel %vm271, %v376, %v390
    %v525 = vsel %vm274, %v523, %v399
    %v526 = vsel %vm274, %v524, %v400
    %v527 = vsel %vm277, %v525, %v409
    %v528 = vsel %vm277, %v526, %v410
    %v529 = vsel %vm280, %v527, %v419
    %v530 = vsel %vm280, %v528, %v420
    %v531 = vsel %vm283, %v529, %v429
    %v532 = vsel %vm283, %v530, %v430
    %v533 = vsel %vm286, %v531, %v439
    %v534 = vsel %vm286, %v532, %v440
    %v535 = vsel %vm289, %v533, %v449
    %v536 = vsel %vm289, %v534, %v450
    %v537 = vsel %vm271, %v459, %v469
    %v538 = vsel %vm271, %v460, %v470
    %v539 = vsel %vm274, %v537, %v479
    %v540 = vsel %vm274, %v538, %v480
    %v541 = vsel %vm277, %v539, %v489
    %v542 = vsel %vm277, %v540, %v490
    %v543 = vsel %vm280, %v541, %v499
    %v544 = vsel %vm280, %v542, %v500
    %v545 = vsel %vm283, %v543, %v509
    %v546 = vsel %vm283, %v544, %v510
    %v547 = vsel %vm286, %v545, %v519
    %v548 = vsel %vm286, %v546, %v520
    %v549 = vpack.c.bf16 %v547, %v535
    %v550 = vpack.c.bf16 %v548, %v536
    %v552 = vand.u32 %v549, %v317
    %v555 = vand.u32 %v550, %v317
    %557 = vmatpush.bf16.msra.mxu0 0
    %558 = vmatpush.bf16.msra.mxu0 0
    %559 = vmatpush.bf16.msra.mxu0 0
    %560 = vmatpush.bf16.msra.mxu0 0
    %561 = vmatpush.bf16.msra.mxu0 0
    %562 = vmatpush.bf16.msra.mxu0 0
    %563 = vmatpush.bf16.msra.mxu0 0
    %564 = vmatpush.bf16.msra.mxu0 %v552
    %565 = vmatmul.bf16.gmra.mxu0 %v313
    %v566 = vpop.f32.mrf.mxu0
    %v567 = vadd.f32 %v309, %v566
    %v568 = vpop.f32.mrf.mxu0
    %569 = vdwg.mxu0
    %570 = vmatpush.bf16.msra.mxu0 0
    %571 = vmatpush.bf16.msra.mxu0 0
    %572 = vmatpush.bf16.msra.mxu0 0
    %573 = vmatpush.bf16.msra.mxu0 0
    %574 = vmatpush.bf16.msra.mxu0 0
    %575 = vmatpush.bf16.msra.mxu0 0
    %576 = vmatpush.bf16.msra.mxu0 0
    %577 = vmatpush.bf16.msra.mxu0 %v555
    %578 = vmatmul.bf16.gmra.mxu0 %v313
    %v579 = vpop.f32.mrf.mxu0
    %v580 = vadd.f32 %v309, %v579
    %v581 = vpop.f32.mrf.mxu0
    %582 = vdwg.mxu0
    %vm583 = vcmp.gt.f32.partialorder %v567, 0.0
    %vm584 = vcmp.gt.f32.partialorder %v580, 0.0
    %v585 = vmul.f32 %v567, 0.2
    %v586 = vmul.f32 %v580, 0.2
    %v587 = vsel %vm583, %v567, %v585
    %v588 = vsel %vm584, %v580, %v586
    %591 = vrot.lane.b32.xlu0 %v587, 5
    %v592 = vpop.permute.xlu0 %591
    %593 = vrot.lane.b32.xlu0 %v588, 5
    %v594 = vpop.permute.xlu0 %593
    %v595 = vsel %vm362, %v592, %v594
    %s599 = scalar_lea.vmem [#allocation2], 24
    %600 = vst.msk [vmem:[%s599] sm:$0xff] %vm367, %v592
    %601 = vst [vmem:[%s599 + $0x8] sm:$0xff] %v595
    %602 = vst.msk [vmem:[%s599 + $0x10] sm:$0xff] %vm362, %v594
    %v603 = vld [vmem:[%s5] sm:$0xf]
    %v604 = vld [vmem:[%s6] sm:$0xff]
    %v605 = vld [vmem:[#allocation2] sm:$0xff]
    %v606 = vld [vmem:[#allocation2 + $0x8] sm:$0xff]
    %v607 = vld [vmem:[#allocation2 + $0x10] sm:$0xff]
    %611 = vrot.lane.b32.xlu0 %v605, 127
    %v612 = vpop.permute.xlu0 %611
    %613 = vrot.lane.b32.xlu0 %v606, 127
    %v614 = vpop.permute.xlu0 %613
    %615 = vrot.lane.b32.xlu0 %v607, 127
    %v616 = vpop.permute.xlu0 %615
    %v617 = vsel %vm58, %v612, %v614
    %v618 = vsel %vm58, %v614, %v616
    %621 = vrot.lane.b32.xlu0 %v605, 126
    %v622 = vpop.permute.xlu0 %621
    %623 = vrot.lane.b32.xlu0 %v606, 126
    %v624 = vpop.permute.xlu0 %623
    %625 = vrot.lane.b32.xlu0 %v607, 126
    %v626 = vpop.permute.xlu0 %625
    %v627 = vsel %vm134, %v622, %v624
    %v628 = vsel %vm134, %v624, %v626
    %631 = vrot.lane.b32.xlu0 %v605, 125
    %v632 = vpop.permute.xlu0 %631
    %633 = vrot.lane.b32.xlu0 %v606, 125
    %v634 = vpop.permute.xlu0 %633
    %635 = vrot.lane.b32.xlu0 %v607, 125
    %v636 = vpop.permute.xlu0 %635
    %v637 = vsel %vm145, %v632, %v634
    %v638 = vsel %vm145, %v634, %v636
    %641 = vrot.lane.b32.xlu0 %v605, 124
    %v642 = vpop.permute.xlu0 %641
    %643 = vrot.lane.b32.xlu0 %v606, 124
    %v644 = vpop.permute.xlu0 %643
    %645 = vrot.lane.b32.xlu0 %v607, 124
    %v646 = vpop.permute.xlu0 %645
    %v647 = vsel %vm156, %v642, %v644
    %v648 = vsel %vm156, %v644, %v646
    %651 = vrot.lane.b32.xlu0 %v605, 123
    %v652 = vpop.permute.xlu0 %651
    %653 = vrot.lane.b32.xlu0 %v606, 123
    %v654 = vpop.permute.xlu0 %653
    %655 = vrot.lane.b32.xlu0 %v607, 123
    %v656 = vpop.permute.xlu0 %655
    %v657 = vsel %vm167, %v652, %v654
    %v658 = vsel %vm167, %v654, %v656
    %661 = vrot.lane.b32.xlu0 %v605, 122
    %v662 = vpop.permute.xlu0 %661
    %663 = vrot.lane.b32.xlu0 %v606, 122
    %v664 = vpop.permute.xlu0 %663
    %665 = vrot.lane.b32.xlu0 %v607, 122
    %v666 = vpop.permute.xlu0 %665
    %v667 = vsel %vm178, %v662, %v664
    %v668 = vsel %vm178, %v664, %v666
    %671 = vrot.lane.b32.xlu0 %v605, 121
    %v672 = vpop.permute.xlu0 %671
    %673 = vrot.lane.b32.xlu0 %v606, 121
    %v674 = vpop.permute.xlu0 %673
    %675 = vrot.lane.b32.xlu0 %v607, 121
    %v676 = vpop.permute.xlu0 %675
    %v677 = vsel %vm189, %v672, %v674
    %v678 = vsel %vm189, %v674, %v676
    %681 = vrot.lane.b32.xlu0 %v605, 120
    %v682 = vpop.permute.xlu0 %681
    %683 = vrot.lane.b32.xlu0 %v606, 120
    %v684 = vpop.permute.xlu0 %683
    %685 = vrot.lane.b32.xlu0 %v607, 120
    %v686 = vpop.permute.xlu0 %685
    %v687 = vsel %vm200, %v682, %v684
    %v688 = vsel %vm200, %v684, %v686
    %691 = vrot.lane.b32.xlu0 %v605, 119
    %v692 = vpop.permute.xlu0 %691
    %693 = vrot.lane.b32.xlu0 %v606, 119
    %v694 = vpop.permute.xlu0 %693
    %695 = vrot.lane.b32.xlu0 %v607, 119
    %v696 = vpop.permute.xlu0 %695
    %v697 = vsel %vm211, %v692, %v694
    %v698 = vsel %vm211, %v694, %v696
    %701 = vrot.lane.b32.xlu0 %v605, 118
    %v702 = vpop.permute.xlu0 %701
    %703 = vrot.lane.b32.xlu0 %v606, 118
    %v704 = vpop.permute.xlu0 %703
    %705 = vrot.lane.b32.xlu0 %v607, 118
    %v706 = vpop.permute.xlu0 %705
    %v707 = vsel %vm222, %v702, %v704
    %v708 = vsel %vm222, %v704, %v706
    %v711 = vpack.c.bf16 %v617, %v605
    %v712 = vpack.c.bf16 %v618, %v606
    %v713 = vpack.c.bf16 %v637, %v627
    %v714 = vpack.c.bf16 %v638, %v628
    %v715 = vpack.c.bf16 %v657, %v647
    %v716 = vpack.c.bf16 %v658, %v648
    %v717 = vpack.c.bf16 %v677, %v667
    %v718 = vpack.c.bf16 %v678, %v668
    %v719 = vpack.c.bf16 %v697, %v687
    %v720 = vpack.c.bf16 %v698, %v688
    %v721 = vpack.c.bf16 %v707, %v707
    %v722 = vpack.c.bf16 %v708, %v708
    %724 = vset.pattern.permute.xlu0 0
    %725 = vperm.xlu0 %724, %v604
    %v726 = vpop.permute.xlu0 %725
    %vm728 = vcmask 719872
    %v730 = vsel %vm728, %v603, 0
    %v733 = vsel %vm280, %v721, 0
    %v736 = vsel %vm280, %v722, 0
    %738 = vmatpush.bf16.msra.mxu0 0
    %739 = vmatpush.bf16.msra.mxu0 0
    %740 = vmatpush.bf16.msra.mxu0 %v733
    %741 = vmatpush.bf16.msra.mxu0 %v719
    %742 = vmatpush.bf16.msra.mxu0 %v717
    %743 = vmatpush.bf16.msra.mxu0 %v715
    %744 = vmatpush.bf16.msra.mxu0 %v713
    %745 = vmatpush.bf16.msra.mxu0 %v711
    %746 = vmatmul.bf16.gmra.mxu0 %v730
    %v747 = vpop.f32.mrf.mxu0
    %v748 = vadd.f32 %v726, %v747
    %v749 = vpop.f32.mrf.mxu0
    %750 = vdwg.mxu0
    %751 = vmatpush.bf16.msra.mxu0 0
    %752 = vmatpush.bf16.msra.mxu0 0
    %753 = vmatpush.bf16.msra.mxu0 %v736
    %754 = vmatpush.bf16.msra.mxu0 %v720
    %755 = vmatpush.bf16.msra.mxu0 %v718
    %756 = vmatpush.bf16.msra.mxu0 %v716
    %757 = vmatpush.bf16.msra.mxu0 %v714
    %758 = vmatpush.bf16.msra.mxu0 %v712
    %759 = vmatmul.bf16.gmra.mxu0 %v730
    %v760 = vpop.f32.mrf.mxu0
    %v761 = vadd.f32 %v726, %v760
    %v762 = vpop.f32.mrf.mxu0
    %763 = vdwg.mxu0
    %vm764 = vcmp.gt.f32.partialorder %v748, 0.0
    %vm765 = vcmp.gt.f32.partialorder %v761, 0.0
    %v766 = vmul.f32 %v748, 0.2
    %v767 = vmul.f32 %v761, 0.2
    %v768 = vsel %vm764, %v748, %v766
    %v769 = vsel %vm765, %v761, %v767
    %772 = vrot.lane.b32.xlu0 %v768, 5
    %v773 = vpop.permute.xlu0 %772
    %774 = vrot.lane.b32.xlu0 %v769, 5
    %v775 = vpop.permute.xlu0 %774
    %v776 = vsel %vm362, %v773, %v775
    %780 = vst.msk [vmem:[#allocation3] sm:$0xff] %vm367, %v773
    %781 = vst [vmem:[#allocation3 + $0x8] sm:$0xff] %v776
    %782 = vst.msk [vmem:[#allocation3 + $0x10] sm:$0xff] %vm362, %v775
    %v783 = vld [vmem:[%s599] sm:$0xff]
    %v784 = vld [vmem:[%s599 + $0x8] sm:$0xff]
    %v785 = vld [vmem:[%s599 + $0x10] sm:$0xff]
    %789 = vrot.lane.b32.xlu0 %v783, 127
    %v790 = vpop.permute.xlu0 %789
    %791 = vrot.lane.b32.xlu0 %v784, 127
    %v792 = vpop.permute.xlu0 %791
    %793 = vrot.lane.b32.xlu0 %v785, 127
    %v794 = vpop.permute.xlu0 %793
    %v795 = vsel %vm58, %v790, %v792
    %v796 = vsel %vm58, %v792, %v794
    %799 = vrot.lane.b32.xlu0 %v783, 126
    %v800 = vpop.permute.xlu0 %799
    %801 = vrot.lane.b32.xlu0 %v784, 126
    %v802 = vpop.permute.xlu0 %801
    %803 = vrot.lane.b32.xlu0 %v785, 126
    %v804 = vpop.permute.xlu0 %803
    %v805 = vsel %vm134, %v800, %v802
    %v806 = vsel %vm134, %v802, %v804
    %809 = vrot.lane.b32.xlu0 %v783, 125
    %v810 = vpop.permute.xlu0 %809
    %811 = vrot.lane.b32.xlu0 %v784, 125
    %v812 = vpop.permute.xlu0 %811
    %813 = vrot.lane.b32.xlu0 %v785, 125
    %v814 = vpop.permute.xlu0 %813
    %v815 = vsel %vm145, %v810, %v812
    %v816 = vsel %vm145, %v812, %v814
    %819 = vrot.lane.b32.xlu0 %v783, 124
    %v820 = vpop.permute.xlu0 %819
    %821 = vrot.lane.b32.xlu0 %v784, 124
    %v822 = vpop.permute.xlu0 %821
    %823 = vrot.lane.b32.xlu0 %v785, 124
    %v824 = vpop.permute.xlu0 %823
    %v825 = vsel %vm156, %v820, %v822
    %v826 = vsel %vm156, %v822, %v824
    %829 = vrot.lane.b32.xlu0 %v783, 123
    %v830 = vpop.permute.xlu0 %829
    %831 = vrot.lane.b32.xlu0 %v784, 123
    %v832 = vpop.permute.xlu0 %831
    %833 = vrot.lane.b32.xlu0 %v785, 123
    %v834 = vpop.permute.xlu0 %833
    %v835 = vsel %vm167, %v830, %v832
    %v836 = vsel %vm167, %v832, %v834
    %839 = vrot.lane.b32.xlu0 %v783, 122
    %v840 = vpop.permute.xlu0 %839
    %841 = vrot.lane.b32.xlu0 %v784, 122
    %v842 = vpop.permute.xlu0 %841
    %843 = vrot.lane.b32.xlu0 %v785, 122
    %v844 = vpop.permute.xlu0 %843
    %v845 = vsel %vm178, %v840, %v842
    %v846 = vsel %vm178, %v842, %v844
    %849 = vrot.lane.b32.xlu0 %v783, 121
    %v850 = vpop.permute.xlu0 %849
    %851 = vrot.lane.b32.xlu0 %v784, 121
    %v852 = vpop.permute.xlu0 %851
    %853 = vrot.lane.b32.xlu0 %v785, 121
    %v854 = vpop.permute.xlu0 %853
    %v855 = vsel %vm189, %v850, %v852
    %v856 = vsel %vm189, %v852, %v854
    %859 = vrot.lane.b32.xlu0 %v783, 120
    %v860 = vpop.permute.xlu0 %859
    %861 = vrot.lane.b32.xlu0 %v784, 120
    %v862 = vpop.permute.xlu0 %861
    %863 = vrot.lane.b32.xlu0 %v785, 120
    %v864 = vpop.permute.xlu0 %863
    %v865 = vsel %vm200, %v860, %v862
    %v866 = vsel %vm200, %v862, %v864
    %869 = vrot.lane.b32.xlu0 %v783, 119
    %v870 = vpop.permute.xlu0 %869
    %871 = vrot.lane.b32.xlu0 %v784, 119
    %v872 = vpop.permute.xlu0 %871
    %873 = vrot.lane.b32.xlu0 %v785, 119
    %v874 = vpop.permute.xlu0 %873
    %v875 = vsel %vm211, %v870, %v872
    %v876 = vsel %vm211, %v872, %v874
    %879 = vrot.lane.b32.xlu0 %v783, 118
    %v880 = vpop.permute.xlu0 %879
    %881 = vrot.lane.b32.xlu0 %v784, 118
    %v882 = vpop.permute.xlu0 %881
    %883 = vrot.lane.b32.xlu0 %v785, 118
    %v884 = vpop.permute.xlu0 %883
    %v885 = vsel %vm222, %v880, %v882
    %v886 = vsel %vm222, %v882, %v884
    %v889 = vpack.c.bf16 %v795, %v783
    %v890 = vpack.c.bf16 %v796, %v784
    %v891 = vpack.c.bf16 %v815, %v805
    %v892 = vpack.c.bf16 %v816, %v806
    %v893 = vpack.c.bf16 %v835, %v825
    %v894 = vpack.c.bf16 %v836, %v826
    %v895 = vpack.c.bf16 %v855, %v845
    %v896 = vpack.c.bf16 %v856, %v846
    %v897 = vpack.c.bf16 %v875, %v865
    %v898 = vpack.c.bf16 %v876, %v866
    %v899 = vpack.c.bf16 %v885, %v885
    %v900 = vpack.c.bf16 %v886, %v886
    %v902 = vsel %vm280, %v899, 0
    %v905 = vsel %vm280, %v900, 0
    %907 = vmatpush.bf16.msra.mxu0 0
    %908 = vmatpush.bf16.msra.mxu0 0
    %909 = vmatpush.bf16.msra.mxu0 %v902
    %910 = vmatpush.bf16.msra.mxu0 %v897
    %911 = vmatpush.bf16.msra.mxu0 %v895
    %912 = vmatpush.bf16.msra.mxu0 %v893
    %913 = vmatpush.bf16.msra.mxu0 %v891
    %914 = vmatpush.bf16.msra.mxu0 %v889
    %915 = vmatmul.bf16.gmra.mxu0 %v730
    %v916 = vpop.f32.mrf.mxu0
    %v917 = vadd.f32 %v726, %v916
    %v918 = vpop.f32.mrf.mxu0
    %919 = vdwg.mxu0
    %920 = vmatpush.bf16.msra.mxu0 0
    %921 = vmatpush.bf16.msra.mxu0 0
    %922 = vmatpush.bf16.msra.mxu0 %v905
    %923 = vmatpush.bf16.msra.mxu0 %v898
    %924 = vmatpush.bf16.msra.mxu0 %v896
    %925 = vmatpush.bf16.msra.mxu0 %v894
    %926 = vmatpush.bf16.msra.mxu0 %v892
    %927 = vmatpush.bf16.msra.mxu0 %v890
    %928 = vmatmul.bf16.gmra.mxu0 %v730
    %v929 = vpop.f32.mrf.mxu0
    %v930 = vadd.f32 %v726, %v929
    %v931 = vpop.f32.mrf.mxu0
    %932 = vdwg.mxu0
    %vm933 = vcmp.gt.f32.partialorder %v917, 0.0
    %vm934 = vcmp.gt.f32.partialorder %v930, 0.0
    %v935 = vmul.f32 %v917, 0.2
    %v936 = vmul.f32 %v930, 0.2
    %v937 = vsel %vm933, %v917, %v935
    %v938 = vsel %vm934, %v930, %v936
    %941 = vrot.lane.b32.xlu0 %v937, 5
    %v942 = vpop.permute.xlu0 %941
    %943 = vrot.lane.b32.xlu0 %v938, 5
    %v944 = vpop.permute.xlu0 %943
    %v945 = vsel %vm362, %v942, %v944
    %s949 = scalar_lea.vmem [#allocation3], 24
    %950 = vst.msk [vmem:[%s949] sm:$0xff] %vm367, %v942
    %951 = vst [vmem:[%s949 + $0x8] sm:$0xff] %v945
    %952 = vst.msk [vmem:[%s949 + $0x10] sm:$0xff] %vm362, %v944
    %v953 = vld [vmem:[%s7] sm:$0xf]
    %v954 = vld [vmem:[%s8] sm:$0xff]
    %v955 = vld [vmem:[#allocation3] sm:$0xff]
    %v956 = vld [vmem:[#allocation3 + $0x8] sm:$0xff]
    %v957 = vld [vmem:[#allocation3 + $0x10] sm:$0xff]
    %961 = vrot.lane.b32.xlu0 %v955, 127
    %v962 = vpop.permute.xlu0 %961
    %963 = vrot.lane.b32.xlu0 %v956, 127
    %v964 = vpop.permute.xlu0 %963
    %965 = vrot.lane.b32.xlu0 %v957, 127
    %v966 = vpop.permute.xlu0 %965
    %v967 = vsel %vm58, %v962, %v964
    %v968 = vsel %vm58, %v964, %v966
    %971 = vrot.lane.b32.xlu0 %v955, 126
    %v972 = vpop.permute.xlu0 %971
    %973 = vrot.lane.b32.xlu0 %v956, 126
    %v974 = vpop.permute.xlu0 %973
    %975 = vrot.lane.b32.xlu0 %v957, 126
    %v976 = vpop.permute.xlu0 %975
    %v977 = vsel %vm134, %v972, %v974
    %v978 = vsel %vm134, %v974, %v976
    %981 = vrot.lane.b32.xlu0 %v955, 125
    %v982 = vpop.permute.xlu0 %981
    %983 = vrot.lane.b32.xlu0 %v956, 125
    %v984 = vpop.permute.xlu0 %983
    %985 = vrot.lane.b32.xlu0 %v957, 125
    %v986 = vpop.permute.xlu0 %985
    %v987 = vsel %vm145, %v982, %v984
    %v988 = vsel %vm145, %v984, %v986
    %991 = vrot.lane.b32.xlu0 %v955, 124
    %v992 = vpop.permute.xlu0 %991
    %993 = vrot.lane.b32.xlu0 %v956, 124
    %v994 = vpop.permute.xlu0 %993
    %995 = vrot.lane.b32.xlu0 %v957, 124
    %v996 = vpop.permute.xlu0 %995
    %v997 = vsel %vm156, %v992, %v994
    %v998 = vsel %vm156, %v994, %v996
    %1001 = vrot.lane.b32.xlu0 %v955, 123
    %v1002 = vpop.permute.xlu0 %1001
    %1003 = vrot.lane.b32.xlu0 %v956, 123
    %v1004 = vpop.permute.xlu0 %1003
    %1005 = vrot.lane.b32.xlu0 %v957, 123
    %v1006 = vpop.permute.xlu0 %1005
    %v1007 = vsel %vm167, %v1002, %v1004
    %v1008 = vsel %vm167, %v1004, %v1006
    %1011 = vrot.lane.b32.xlu0 %v955, 122
    %v1012 = vpop.permute.xlu0 %1011
    %1013 = vrot.lane.b32.xlu0 %v956, 122
    %v1014 = vpop.permute.xlu0 %1013
    %1015 = vrot.lane.b32.xlu0 %v957, 122
    %v1016 = vpop.permute.xlu0 %1015
    %v1017 = vsel %vm178, %v1012, %v1014
    %v1018 = vsel %vm178, %v1014, %v1016
    %1021 = vrot.lane.b32.xlu0 %v955, 121
    %v1022 = vpop.permute.xlu0 %1021
    %1023 = vrot.lane.b32.xlu0 %v956, 121
    %v1024 = vpop.permute.xlu0 %1023
    %1025 = vrot.lane.b32.xlu0 %v957, 121
    %v1026 = vpop.permute.xlu0 %1025
    %v1027 = vsel %vm189, %v1022, %v1024
    %v1028 = vsel %vm189, %v1024, %v1026
    %1031 = vrot.lane.b32.xlu0 %v955, 120
    %v1032 = vpop.permute.xlu0 %1031
    %1033 = vrot.lane.b32.xlu0 %v956, 120
    %v1034 = vpop.permute.xlu0 %1033
    %1035 = vrot.lane.b32.xlu0 %v957, 120
    %v1036 = vpop.permute.xlu0 %1035
    %v1037 = vsel %vm200, %v1032, %v1034
    %v1038 = vsel %vm200, %v1034, %v1036
    %1041 = vrot.lane.b32.xlu0 %v955, 119
    %v1042 = vpop.permute.xlu0 %1041
    %1043 = vrot.lane.b32.xlu0 %v956, 119
    %v1044 = vpop.permute.xlu0 %1043
    %1045 = vrot.lane.b32.xlu0 %v957, 119
    %v1046 = vpop.permute.xlu0 %1045
    %v1047 = vsel %vm211, %v1042, %v1044
    %v1048 = vsel %vm211, %v1044, %v1046
    %1051 = vrot.lane.b32.xlu0 %v955, 118
    %v1052 = vpop.permute.xlu0 %1051
    %1053 = vrot.lane.b32.xlu0 %v956, 118
    %v1054 = vpop.permute.xlu0 %1053
    %1055 = vrot.lane.b32.xlu0 %v957, 118
    %v1056 = vpop.permute.xlu0 %1055
    %v1057 = vsel %vm222, %v1052, %v1054
    %v1058 = vsel %vm222, %v1054, %v1056
    %v1061 = vpack.c.bf16 %v967, %v955
    %v1062 = vpack.c.bf16 %v968, %v956
    %v1063 = vpack.c.bf16 %v987, %v977
    %v1064 = vpack.c.bf16 %v988, %v978
    %v1065 = vpack.c.bf16 %v1007, %v997
    %v1066 = vpack.c.bf16 %v1008, %v998
    %v1067 = vpack.c.bf16 %v1027, %v1017
    %v1068 = vpack.c.bf16 %v1028, %v1018
    %v1069 = vpack.c.bf16 %v1047, %v1037
    %v1070 = vpack.c.bf16 %v1048, %v1038
    %v1071 = vpack.c.bf16 %v1057, %v1057
    %v1072 = vpack.c.bf16 %v1058, %v1058
    %1074 = vset.pattern.permute.xlu0 0
    %1075 = vperm.xlu0 %1074, %v954
    %v1076 = vpop.permute.xlu0 %1075
    %v1079 = vsel %vm728, %v953, 0
    %v1082 = vsel %vm280, %v1071, 0
    %v1085 = vsel %vm280, %v1072, 0
    %1087 = vmatpush.bf16.msra.mxu0 0
    %1088 = vmatpush.bf16.msra.mxu0 0
    %1089 = vmatpush.bf16.msra.mxu0 %v1082
    %1090 = vmatpush.bf16.msra.mxu0 %v1069
    %1091 = vmatpush.bf16.msra.mxu0 %v1067
    %1092 = vmatpush.bf16.msra.mxu0 %v1065
    %1093 = vmatpush.bf16.msra.mxu0 %v1063
    %1094 = vmatpush.bf16.msra.mxu0 %v1061
    %1095 = vmatmul.bf16.gmra.mxu0 %v1079
    %v1096 = vpop.f32.mrf.mxu0
    %v1097 = vadd.f32 %v1076, %v1096
    %v1098 = vpop.f32.mrf.mxu0
    %1099 = vdwg.mxu0
    %1100 = vmatpush.bf16.msra.mxu0 0
    %1101 = vmatpush.bf16.msra.mxu0 0
    %1102 = vmatpush.bf16.msra.mxu0 %v1085
    %1103 = vmatpush.bf16.msra.mxu0 %v1070
    %1104 = vmatpush.bf16.msra.mxu0 %v1068
    %1105 = vmatpush.bf16.msra.mxu0 %v1066
    %1106 = vmatpush.bf16.msra.mxu0 %v1064
    %1107 = vmatpush.bf16.msra.mxu0 %v1062
    %1108 = vmatmul.bf16.gmra.mxu0 %v1079
    %v1109 = vpop.f32.mrf.mxu0
    %v1110 = vadd.f32 %v1076, %v1109
    %v1111 = vpop.f32.mrf.mxu0
    %1112 = vdwg.mxu0
    %vm1113 = vcmp.gt.f32.partialorder %v1097, 0.0
    %vm1114 = vcmp.gt.f32.partialorder %v1110, 0.0
    %v1115 = vmul.f32 %v1097, 0.2
    %v1116 = vmul.f32 %v1110, 0.2
    %v1117 = vsel %vm1113, %v1097, %v1115
    %v1118 = vsel %vm1114, %v1110, %v1116
    %1121 = vrot.lane.b32.xlu0 %v1117, 2
    %v1122 = vpop.permute.xlu0 %1121
    %1123 = vrot.lane.b32.xlu0 %v1118, 2
    %v1124 = vpop.permute.xlu0 %1123
    %vm1125 = vcmask 15360
    %v1126 = vsel %vm1125, %v1122, %v1124
    %vm1130 = vcmask 1047568
    %1131 = vst.msk [vmem:[#allocation4] sm:$0xff] %vm1130, %v1122
    %1132 = vst [vmem:[#allocation4 + $0x8] sm:$0xff] %v1126
    %1133 = vst.msk [vmem:[#allocation4 + $0x10] sm:$0xff] %vm1125, %v1124
    %v1134 = vld [vmem:[%s949] sm:$0xff]
    %v1135 = vld [vmem:[%s949 + $0x8] sm:$0xff]
    %v1136 = vld [vmem:[%s949 + $0x10] sm:$0xff]
    %1140 = vrot.lane.b32.xlu0 %v1134, 127
    %v1141 = vpop.permute.xlu0 %1140
    %1142 = vrot.lane.b32.xlu0 %v1135, 127
    %v1143 = vpop.permute.xlu0 %1142
    %1144 = vrot.lane.b32.xlu0 %v1136, 127
    %v1145 = vpop.permute.xlu0 %1144
    %v1146 = vsel %vm58, %v1141, %v1143
    %v1147 = vsel %vm58, %v1143, %v1145
    %1150 = vrot.lane.b32.xlu0 %v1134, 126
    %v1151 = vpop.permute.xlu0 %1150
    %1152 = vrot.lane.b32.xlu0 %v1135, 126
    %v1153 = vpop.permute.xlu0 %1152
    %1154 = vrot.lane.b32.xlu0 %v1136, 126
    %v1155 = vpop.permute.xlu0 %1154
    %v1156 = vsel %vm134, %v1151, %v1153
    %v1157 = vsel %vm134, %v1153, %v1155
    %1160 = vrot.lane.b32.xlu0 %v1134, 125
    %v1161 = vpop.permute.xlu0 %1160
    %1162 = vrot.lane.b32.xlu0 %v1135, 125
    %v1163 = vpop.permute.xlu0 %1162
    %1164 = vrot.lane.b32.xlu0 %v1136, 125
    %v1165 = vpop.permute.xlu0 %1164
    %v1166 = vsel %vm145, %v1161, %v1163
    %v1167 = vsel %vm145, %v1163, %v1165
    %1170 = vrot.lane.b32.xlu0 %v1134, 124
    %v1171 = vpop.permute.xlu0 %1170
    %1172 = vrot.lane.b32.xlu0 %v1135, 124
    %v1173 = vpop.permute.xlu0 %1172
    %1174 = vrot.lane.b32.xlu0 %v1136, 124
    %v1175 = vpop.permute.xlu0 %1174
    %v1176 = vsel %vm156, %v1171, %v1173
    %v1177 = vsel %vm156, %v1173, %v1175
    %1180 = vrot.lane.b32.xlu0 %v1134, 123
    %v1181 = vpop.permute.xlu0 %1180
    %1182 = vrot.lane.b32.xlu0 %v1135, 123
    %v1183 = vpop.permute.xlu0 %1182
    %1184 = vrot.lane.b32.xlu0 %v1136, 123
    %v1185 = vpop.permute.xlu0 %1184
    %v1186 = vsel %vm167, %v1181, %v1183
    %v1187 = vsel %vm167, %v1183, %v1185
    %1190 = vrot.lane.b32.xlu0 %v1134, 122
    %v1191 = vpop.permute.xlu0 %1190
    %1192 = vrot.lane.b32.xlu0 %v1135, 122
    %v1193 = vpop.permute.xlu0 %1192
    %1194 = vrot.lane.b32.xlu0 %v1136, 122
    %v1195 = vpop.permute.xlu0 %1194
    %v1196 = vsel %vm178, %v1191, %v1193
    %v1197 = vsel %vm178, %v1193, %v1195
    %1200 = vrot.lane.b32.xlu0 %v1134, 121
    %v1201 = vpop.permute.xlu0 %1200
    %1202 = vrot.lane.b32.xlu0 %v1135, 121
    %v1203 = vpop.permute.xlu0 %1202
    %1204 = vrot.lane.b32.xlu0 %v1136, 121
    %v1205 = vpop.permute.xlu0 %1204
    %v1206 = vsel %vm189, %v1201, %v1203
    %v1207 = vsel %vm189, %v1203, %v1205
    %1210 = vrot.lane.b32.xlu0 %v1134, 120
    %v1211 = vpop.permute.xlu0 %1210
    %1212 = vrot.lane.b32.xlu0 %v1135, 120
    %v1213 = vpop.permute.xlu0 %1212
    %1214 = vrot.lane.b32.xlu0 %v1136, 120
    %v1215 = vpop.permute.xlu0 %1214
    %v1216 = vsel %vm200, %v1211, %v1213
    %v1217 = vsel %vm200, %v1213, %v1215
    %1220 = vrot.lane.b32.xlu0 %v1134, 119
    %v1221 = vpop.permute.xlu0 %1220
    %1222 = vrot.lane.b32.xlu0 %v1135, 119
    %v1223 = vpop.permute.xlu0 %1222
    %1224 = vrot.lane.b32.xlu0 %v1136, 119
    %v1225 = vpop.permute.xlu0 %1224
    %v1226 = vsel %vm211, %v1221, %v1223
    %v1227 = vsel %vm211, %v1223, %v1225
    %1230 = vrot.lane.b32.xlu0 %v1134, 118
    %v1231 = vpop.permute.xlu0 %1230
    %1232 = vrot.lane.b32.xlu0 %v1135, 118
    %v1233 = vpop.permute.xlu0 %1232
    %1234 = vrot.lane.b32.xlu0 %v1136, 118
    %v1235 = vpop.permute.xlu0 %1234
    %v1236 = vsel %vm222, %v1231, %v1233
    %v1237 = vsel %vm222, %v1233, %v1235
    %v1240 = vpack.c.bf16 %v1146, %v1134
    %v1241 = vpack.c.bf16 %v1147, %v1135
    %v1242 = vpack.c.bf16 %v1166, %v1156
    %v1243 = vpack.c.bf16 %v1167, %v1157
    %v1244 = vpack.c.bf16 %v1186, %v1176
    %v1245 = vpack.c.bf16 %v1187, %v1177
    %v1246 = vpack.c.bf16 %v1206, %v1196
    %v1247 = vpack.c.bf16 %v1207, %v1197
    %v1248 = vpack.c.bf16 %v1226, %v1216
    %v1249 = vpack.c.bf16 %v1227, %v1217
    %v1250 = vpack.c.bf16 %v1236, %v1236
    %v1251 = vpack.c.bf16 %v1237, %v1237
    %v1253 = vsel %vm280, %v1250, 0
    %v1256 = vsel %vm280, %v1251, 0
    %1258 = vmatpush.bf16.msra.mxu0 0
    %1259 = vmatpush.bf16.msra.mxu0 0
    %1260 = vmatpush.bf16.msra.mxu0 %v1253
    %1261 = vmatpush.bf16.msra.mxu0 %v1248
    %1262 = vmatpush.bf16.msra.mxu0 %v1246
    %1263 = vmatpush.bf16.msra.mxu0 %v1244
    %1264 = vmatpush.bf16.msra.mxu0 %v1242
    %1265 = vmatpush.bf16.msra.mxu0 %v1240
    %1266 = vmatmul.bf16.gmra.mxu0 %v1079
    %v1267 = vpop.f32.mrf.mxu0
    %v1268 = vadd.f32 %v1076, %v1267
    %v1269 = vpop.f32.mrf.mxu0
    %1270 = vdwg.mxu0
    %1271 = vmatpush.bf16.msra.mxu0 0
    %1272 = vmatpush.bf16.msra.mxu0 0
    %1273 = vmatpush.bf16.msra.mxu0 %v1256
    %1274 = vmatpush.bf16.msra.mxu0 %v1249
    %1275 = vmatpush.bf16.msra.mxu0 %v1247
    %1276 = vmatpush.bf16.msra.mxu0 %v1245
    %1277 = vmatpush.bf16.msra.mxu0 %v1243
    %1278 = vmatpush.bf16.msra.mxu0 %v1241
    %1279 = vmatmul.bf16.gmra.mxu0 %v1079
    %v1280 = vpop.f32.mrf.mxu0
    %v1281 = vadd.f32 %v1076, %v1280
    %v1282 = vpop.f32.mrf.mxu0
    %1283 = vdwg.mxu0
    %vm1284 = vcmp.gt.f32.partialorder %v1268, 0.0
    %vm1285 = vcmp.gt.f32.partialorder %v1281, 0.0
    %v1286 = vmul.f32 %v1268, 0.2
    %v1287 = vmul.f32 %v1281, 0.2
    %v1288 = vsel %vm1284, %v1268, %v1286
    %v1289 = vsel %vm1285, %v1281, %v1287
    %1292 = vrot.lane.b32.xlu0 %v1288, 2
    %v1293 = vpop.permute.xlu0 %1292
    %1294 = vrot.lane.b32.xlu0 %v1289, 2
    %v1295 = vpop.permute.xlu0 %1294
    %v1296 = vsel %vm1125, %v1293, %v1295
    %s1300 = scalar_lea.vmem [#allocation4], 24
    %1301 = vst.msk [vmem:[%s1300] sm:$0xff] %vm1130, %v1293
    %1302 = vst [vmem:[%s1300 + $0x8] sm:$0xff] %v1296
    %1303 = vst.msk [vmem:[%s1300 + $0x10] sm:$0xff] %vm1125, %v1295
    %v1304 = vld [vmem:[%s9] sm:$0xf]
    %v1305 = vld [vmem:[%s9 + $0x4] sm:$0xf]
    %v1306 = vld [vmem:[%s10] sm:$0xff]
    %v1307 = vld [vmem:[%s10 + $0x8] sm:$0xff]
    %v1308 = vld [vmem:[#allocation4] sm:$0xff]
    %v1309 = vld [vmem:[#allocation4 + $0x8] sm:$0xff]
    %v1310 = vld [vmem:[#allocation4 + $0x10] sm:$0xff]
    %1314 = vrot.lane.b32.xlu0 %v1308, 127
    %v1315 = vpop.permute.xlu0 %1314
    %1316 = vrot.lane.b32.xlu0 %v1309, 127
    %v1317 = vpop.permute.xlu0 %1316
    %1318 = vrot.lane.b32.xlu0 %v1310, 127
    %v1319 = vpop.permute.xlu0 %1318
    %v1320 = vsel %vm58, %v1315, %v1317
    %v1321 = vsel %vm58, %v1317, %v1319
    %1324 = vrot.lane.b32.xlu0 %v1308, 126
    %v1325 = vpop.permute.xlu0 %1324
    %1326 = vrot.lane.b32.xlu0 %v1309, 126
    %v1327 = vpop.permute.xlu0 %1326
    %1328 = vrot.lane.b32.xlu0 %v1310, 126
    %v1329 = vpop.permute.xlu0 %1328
    %v1330 = vsel %vm134, %v1325, %v1327
    %v1331 = vsel %vm134, %v1327, %v1329
    %1334 = vrot.lane.b32.xlu0 %v1308, 125
    %v1335 = vpop.permute.xlu0 %1334
    %1336 = vrot.lane.b32.xlu0 %v1309, 125
    %v1337 = vpop.permute.xlu0 %1336
    %1338 = vrot.lane.b32.xlu0 %v1310, 125
    %v1339 = vpop.permute.xlu0 %1338
    %v1340 = vsel %vm145, %v1335, %v1337
    %v1341 = vsel %vm145, %v1337, %v1339
    %1344 = vrot.lane.b32.xlu0 %v1308, 124
    %v1345 = vpop.permute.xlu0 %1344
    %1346 = vrot.lane.b32.xlu0 %v1309, 124
    %v1347 = vpop.permute.xlu0 %1346
    %1348 = vrot.lane.b32.xlu0 %v1310, 124
    %v1349 = vpop.permute.xlu0 %1348
    %v1350 = vsel %vm156, %v1345, %v1347
    %v1351 = vsel %vm156, %v1347, %v1349
    %v1354 = vpack.c.bf16 %v1320, %v1308
    %v1355 = vpack.c.bf16 %v1321, %v1309
    %v1356 = vpack.c.bf16 %v1340, %v1330
    %v1357 = vpack.c.bf16 %v1341, %v1331
    %v1358 = vpack.c.bf16 %v1350, %v1350
    %v1359 = vpack.c.bf16 %v1351, %v1351
    %1361 = vset.pattern.permute.xlu0 0
    %1362 = vperm.xlu0 %1361, %v1306
    %v1363 = vpop.permute.xlu0 %1362
    %1366 = vset.pattern.permute.xlu0 0
    %1367 = vperm.xlu0 %1366, %v1307
    %v1368 = vpop.permute.xlu0 %1367
    %v1372 = vunpack.c.l.b16 %v1304
    %v1373 = vunpack.c.l.b16 %v1305
    %v1374 = vpack.c.b16 %v1373, %v1372
    %vm1375 = vcmask 326656
    %v1377 = vsel %vm1375, %v1374, 0
    %v1380 = vsel %vm280, %v1358, 0
    %v1383 = vsel %vm280, %v1359, 0
    %1385 = vmatpush.bf16.msra.mxu0 0
    %1386 = vmatpush.bf16.msra.mxu0 0
    %1387 = vmatpush.bf16.msra.mxu0 0
    %1388 = vmatpush.bf16.msra.mxu0 0
    %1389 = vmatpush.bf16.msra.mxu0 0
    %1390 = vmatpush.bf16.msra.mxu0 %v1380
    %1391 = vmatpush.bf16.msra.mxu0 %v1356
    %1392 = vmatpush.bf16.msra.mxu0 %v1354
    %1393 = vmatmul.bf16.gmra.mxu0 %v1377
    %v1394 = vpop.f32.mrf.mxu0
    %v1395 = vadd.f32 %v1363, %v1394
    %v1396 = vpop.f32.mrf.mxu0
    %v1397 = vadd.f32 %v1368, %v1396
    %1398 = vdwg.mxu0
    %1399 = vmatpush.bf16.msra.mxu0 0
    %1400 = vmatpush.bf16.msra.mxu0 0
    %1401 = vmatpush.bf16.msra.mxu0 0
    %1402 = vmatpush.bf16.msra.mxu0 0
    %1403 = vmatpush.bf16.msra.mxu0 0
    %1404 = vmatpush.bf16.msra.mxu0 %v1383
    %1405 = vmatpush.bf16.msra.mxu0 %v1357
    %1406 = vmatpush.bf16.msra.mxu0 %v1355
    %1407 = vmatmul.bf16.gmra.mxu0 %v1377
    %v1408 = vpop.f32.mrf.mxu0
    %v1409 = vadd.f32 %v1363, %v1408
    %v1410 = vpop.f32.mrf.mxu0
    %v1411 = vadd.f32 %v1368, %v1410
    %1412 = vdwg.mxu0
    %vm1413 = vcmp.gt.f32.partialorder %v1395, 0.0
    %vm1414 = vcmp.gt.f32.partialorder %v1409, 0.0
    %vm1415 = vcmp.gt.f32.partialorder %v1397, 0.0
    %vm1416 = vcmp.gt.f32.partialorder %v1411, 0.0
    %v1417 = vmul.f32 %v1395, 0.2
    %v1418 = vmul.f32 %v1409, 0.2
    %v1419 = vmul.f32 %v1397, 0.2
    %v1420 = vmul.f32 %v1411, 0.2
    %v1421 = vsel %vm1413, %v1395, %v1417
    %v1422 = vsel %vm1414, %v1409, %v1418
    %v1423 = vsel %vm1415, %v1397, %v1419
    %v1424 = vsel %vm1416, %v1411, %v1420
    %1429 = vrot.lane.b32.xlu0 %v1421, 1
    %v1430 = vpop.permute.xlu0 %1429
    %1431 = vrot.lane.b32.xlu0 %v1422, 1
    %v1432 = vpop.permute.xlu0 %1431
    %1433 = vrot.lane.b32.xlu0 %v1423, 1
    %v1434 = vpop.permute.xlu0 %1433
    %1435 = vrot.lane.b32.xlu0 %v1424, 1
    %v1436 = vpop.permute.xlu0 %1435
    %vm1437 = vcmask 7168
    %v1438 = vsel %vm1437, %v1430, %v1432
    %v1439 = vsel %vm1437, %v1434, %v1436
    %vm1446 = vcmask 1047560
    %1447 = vst.msk [vmem:[#allocation5] sm:$0xff] %vm1446, %v1430
    %1448 = vst [vmem:[#allocation5 + $0x8] sm:$0xff] %v1438
    %1449 = vst.msk [vmem:[#allocation5 + $0x10] sm:$0xff] %vm1437, %v1432
    %1450 = vst.msk [vmem:[#allocation5 + $0x18] sm:$0xff] %vm1446, %v1434
    %1451 = vst [vmem:[#allocation5 + $0x20] sm:$0xff] %v1439
    %1452 = vst.msk [vmem:[#allocation5 + $0x28] sm:$0xff] %vm1437, %v1436
    %v1453 = vld [vmem:[%s1300] sm:$0xff]
    %v1454 = vld [vmem:[%s1300 + $0x8] sm:$0xff]
    %v1455 = vld [vmem:[%s1300 + $0x10] sm:$0xff]
    %1459 = vrot.lane.b32.xlu0 %v1453, 127
    %v1460 = vpop.permute.xlu0 %1459
    %1461 = vrot.lane.b32.xlu0 %v1454, 127
    %v1462 = vpop.permute.xlu0 %1461
    %1463 = vrot.lane.b32.xlu0 %v1455, 127
    %v1464 = vpop.permute.xlu0 %1463
    %v1465 = vsel %vm58, %v1460, %v1462
    %v1466 = vsel %vm58, %v1462, %v1464
    %1469 = vrot.lane.b32.xlu0 %v1453, 126
    %v1470 = vpop.permute.xlu0 %1469
    %1471 = vrot.lane.b32.xlu0 %v1454, 126
    %v1472 = vpop.permute.xlu0 %1471
    %1473 = vrot.lane.b32.xlu0 %v1455, 126
    %v1474 = vpop.permute.xlu0 %1473
    %v1475 = vsel %vm134, %v1470, %v1472
    %v1476 = vsel %vm134, %v1472, %v1474
    %1479 = vrot.lane.b32.xlu0 %v1453, 125
    %v1480 = vpop.permute.xlu0 %1479
    %1481 = vrot.lane.b32.xlu0 %v1454, 125
    %v1482 = vpop.permute.xlu0 %1481
    %1483 = vrot.lane.b32.xlu0 %v1455, 125
    %v1484 = vpop.permute.xlu0 %1483
    %v1485 = vsel %vm145, %v1480, %v1482
    %v1486 = vsel %vm145, %v1482, %v1484
    %1489 = vrot.lane.b32.xlu0 %v1453, 124
    %v1490 = vpop.permute.xlu0 %1489
    %1491 = vrot.lane.b32.xlu0 %v1454, 124
    %v1492 = vpop.permute.xlu0 %1491
    %1493 = vrot.lane.b32.xlu0 %v1455, 124
    %v1494 = vpop.permute.xlu0 %1493
    %v1495 = vsel %vm156, %v1490, %v1492
    %v1496 = vsel %vm156, %v1492, %v1494
    %v1499 = vpack.c.bf16 %v1465, %v1453
    %v1500 = vpack.c.bf16 %v1466, %v1454
    %v1501 = vpack.c.bf16 %v1485, %v1475
    %v1502 = vpack.c.bf16 %v1486, %v1476
    %v1503 = vpack.c.bf16 %v1495, %v1495
    %v1504 = vpack.c.bf16 %v1496, %v1496
    %v1506 = vsel %vm280, %v1503, 0
    %v1509 = vsel %vm280, %v1504, 0
    %1511 = vmatpush.bf16.msra.mxu0 0
    %1512 = vmatpush.bf16.msra.mxu0 0
    %1513 = vmatpush.bf16.msra.mxu0 0
    %1514 = vmatpush.bf16.msra.mxu0 0
    %1515 = vmatpush.bf16.msra.mxu0 0
    %1516 = vmatpush.bf16.msra.mxu0 %v1506
    %1517 = vmatpush.bf16.msra.mxu0 %v1501
    %1518 = vmatpush.bf16.msra.mxu0 %v1499
    %1519 = vmatmul.bf16.gmra.mxu0 %v1377
    %v1520 = vpop.f32.mrf.mxu0
    %v1521 = vadd.f32 %v1363, %v1520
    %v1522 = vpop.f32.mrf.mxu0
    %v1523 = vadd.f32 %v1368, %v1522
    %1524 = vdwg.mxu0
    %1525 = vmatpush.bf16.msra.mxu0 0
    %1526 = vmatpush.bf16.msra.mxu0 0
    %1527 = vmatpush.bf16.msra.mxu0 0
    %1528 = vmatpush.bf16.msra.mxu0 0
    %1529 = vmatpush.bf16.msra.mxu0 0
    %1530 = vmatpush.bf16.msra.mxu0 %v1509
    %1531 = vmatpush.bf16.msra.mxu0 %v1502
    %1532 = vmatpush.bf16.msra.mxu0 %v1500
    %1533 = vmatmul.bf16.gmra.mxu0 %v1377
    %v1534 = vpop.f32.mrf.mxu0
    %v1535 = vadd.f32 %v1363, %v1534
    %v1536 = vpop.f32.mrf.mxu0
    %v1537 = vadd.f32 %v1368, %v1536
    %1538 = vdwg.mxu0
    %vm1539 = vcmp.gt.f32.partialorder %v1521, 0.0
    %vm1540 = vcmp.gt.f32.partialorder %v1535, 0.0
    %vm1541 = vcmp.gt.f32.partialorder %v1523, 0.0
    %vm1542 = vcmp.gt.f32.partialorder %v1537, 0.0
    %v1543 = vmul.f32 %v1521, 0.2
    %v1544 = vmul.f32 %v1535, 0.2
    %v1545 = vmul.f32 %v1523, 0.2
    %v1546 = vmul.f32 %v1537, 0.2
    %v1547 = vsel %vm1539, %v1521, %v1543
    %v1548 = vsel %vm1540, %v1535, %v1544
    %v1549 = vsel %vm1541, %v1523, %v1545
    %v1550 = vsel %vm1542, %v1537, %v1546
    %1555 = vrot.lane.b32.xlu0 %v1547, 1
    %v1556 = vpop.permute.xlu0 %1555
    %1557 = vrot.lane.b32.xlu0 %v1548, 1
    %v1558 = vpop.permute.xlu0 %1557
    %1559 = vrot.lane.b32.xlu0 %v1549, 1
    %v1560 = vpop.permute.xlu0 %1559
    %1561 = vrot.lane.b32.xlu0 %v1550, 1
    %v1562 = vpop.permute.xlu0 %1561
    %v1563 = vsel %vm1437, %v1556, %v1558
    %v1564 = vsel %vm1437, %v1560, %v1562
    %s1571 = scalar_lea.vmem [#allocation5], 48
    %1572 = vst.msk [vmem:[%s1571] sm:$0xff] %vm1446, %v1556
    %1573 = vst [vmem:[%s1571 + $0x8] sm:$0xff] %v1563
    %1574 = vst.msk [vmem:[%s1571 + $0x10] sm:$0xff] %vm1437, %v1558
    %1575 = vst.msk [vmem:[%s1571 + $0x18] sm:$0xff] %vm1446, %v1560
    %1576 = vst [vmem:[%s1571 + $0x20] sm:$0xff] %v1564
    %1577 = vst.msk [vmem:[%s1571 + $0x28] sm:$0xff] %vm1437, %v1562
    %v1578 = vld [vmem:[%s11] sm:$0x1]
    %v1579 = vld [vmem:[#allocation6] sm:$0x1]
    %v1580 = vld [vmem:[#allocation5] sm:$0xff]
    %v1581 = vld [vmem:[#allocation5 + $0x8] sm:$0xff]
    %v1582 = vld [vmem:[#allocation5 + $0x18] sm:$0xff]
    %v1583 = vld [vmem:[#allocation5 + $0x20] sm:$0xff]
    %v1584 = vld [vmem:[#allocation5 + $0x10] sm:$0xff]
    %v1585 = vld [vmem:[#allocation5 + $0x28] sm:$0xff]
    %1592 = vrot.lane.b32.xlu0 %v1580, 127
    %v1593 = vpop.permute.xlu0 %1592
    %1594 = vrot.lane.b32.xlu0 %v1581, 127
    %v1595 = vpop.permute.xlu0 %1594
    %1596 = vrot.lane.b32.xlu0 %v1584, 127
    %v1597 = vpop.permute.xlu0 %1596
    %1598 = vrot.lane.b32.xlu0 %v1582, 127
    %v1599 = vpop.permute.xlu0 %1598
    %1600 = vrot.lane.b32.xlu0 %v1583, 127
    %v1601 = vpop.permute.xlu0 %1600
    %1602 = vrot.lane.b32.xlu0 %v1585, 127
    %v1603 = vpop.permute.xlu0 %1602
    %v1604 = vsel %vm58, %v1593, %v1595
    %v1605 = vsel %vm58, %v1595, %v1597
    %v1606 = vsel %vm58, %v1599, %v1601
    %v1607 = vsel %vm58, %v1601, %v1603
    %1612 = vrot.lane.b32.xlu0 %v1580, 126
    %v1613 = vpop.permute.xlu0 %1612
    %1614 = vrot.lane.b32.xlu0 %v1581, 126
    %v1615 = vpop.permute.xlu0 %1614
    %1616 = vrot.lane.b32.xlu0 %v1584, 126
    %v1617 = vpop.permute.xlu0 %1616
    %1618 = vrot.lane.b32.xlu0 %v1582, 126
    %v1619 = vpop.permute.xlu0 %1618
    %1620 = vrot.lane.b32.xlu0 %v1583, 126
    %v1621 = vpop.permute.xlu0 %1620
    %1622 = vrot.lane.b32.xlu0 %v1585, 126
    %v1623 = vpop.permute.xlu0 %1622
    %v1624 = vsel %vm134, %v1613, %v1615
    %v1625 = vsel %vm134, %v1615, %v1617
    %v1626 = vsel %vm134, %v1619, %v1621
    %v1627 = vsel %vm134, %v1621, %v1623
    %v1632 = vpack.c.bf16 %v1582, %v1580
    %v1633 = vpack.c.bf16 %v1583, %v1581
    %v1634 = vpack.c.bf16 %v1606, %v1604
    %v1635 = vpack.c.bf16 %v1607, %v1605
    %v1636 = vpack.c.bf16 %v1626, %v1624
    %v1637 = vpack.c.bf16 %v1627, %v1625
    %1639 = vset.pattern.permute.xlu0 0
    %1640 = vperm.xlu0 %1639, %v1579
    %v1641 = vpop.permute.xlu0 %1640
    %v1643 = vperm.slane %v1641, 0
    %vm1644 = vcmask 392192
    %v1646 = vsel %vm1644, %v1578, 0
    %1648 = vmatpush.bf16.msra.mxu0 0
    %1649 = vmatpush.bf16.msra.mxu0 0
    %1650 = vmatpush.bf16.msra.mxu0 0
    %1651 = vmatpush.bf16.msra.mxu0 0
    %1652 = vmatpush.bf16.msra.mxu0 0
    %1653 = vmatpush.bf16.msra.mxu0 %v1636
    %1654 = vmatpush.bf16.msra.mxu0 %v1634
    %1655 = vmatpush.bf16.msra.mxu0 %v1632
    %1656 = vmatmul.bf16.gmra.mxu0 %v1646
    %v1657 = vpop.f32.mrf.mxu0
    %v1658 = vadd.f32 %v1643, %v1657
    %v1659 = vpop.f32.mrf.mxu0
    %1660 = vdwg.mxu0
    %1661 = vmatpush.bf16.msra.mxu0 0
    %1662 = vmatpush.bf16.msra.mxu0 0
    %1663 = vmatpush.bf16.msra.mxu0 0
    %1664 = vmatpush.bf16.msra.mxu0 0
    %1665 = vmatpush.bf16.msra.mxu0 0
    %1666 = vmatpush.bf16.msra.mxu0 %v1637
    %1667 = vmatpush.bf16.msra.mxu0 %v1635
    %1668 = vmatpush.bf16.msra.mxu0 %v1633
    %1669 = vmatmul.bf16.gmra.mxu0 %v1646
    %v1670 = vpop.f32.mrf.mxu0
    %v1671 = vadd.f32 %v1643, %v1670
    %v1672 = vpop.f32.mrf.mxu0
    %1673 = vdwg.mxu0
    %v1676 = vrot.slane %v1671, 7
    %v1677 = vsel %vm271, %v1658, %v1676
    %v1679 = vlaneseq
    %vm1680 = vcmp.ge.s32.totalorder %v1679, 0
    %vm1681 = vcmp.lt.s32.totalorder %v1679, 256
    %vm1682 = vmand %vm1680, %vm1681
    %1683 = vst.msk [vmem:[#allocation7] sm:$0x3] %vm1682, %v1677
    %v1684 = vld [vmem:[%s1571] sm:$0xff]
    %v1685 = vld [vmem:[%s1571 + $0x8] sm:$0xff]
    %v1686 = vld [vmem:[%s1571 + $0x18] sm:$0xff]
    %v1687 = vld [vmem:[%s1571 + $0x20] sm:$0xff]
    %v1688 = vld [vmem:[%s1571 + $0x10] sm:$0xff]
    %v1689 = vld [vmem:[%s1571 + $0x28] sm:$0xff]
    %1696 = vrot.lane.b32.xlu0 %v1684, 127
    %v1697 = vpop.permute.xlu0 %1696
    %1698 = vrot.lane.b32.xlu0 %v1685, 127
    %v1699 = vpop.permute.xlu0 %1698
    %1700 = vrot.lane.b32.xlu0 %v1688, 127
    %v1701 = vpop.permute.xlu0 %1700
    %1702 = vrot.lane.b32.xlu0 %v1686, 127
    %v1703 = vpop.permute.xlu0 %1702
    %1704 = vrot.lane.b32.xlu0 %v1687, 127
    %v1705 = vpop.permute.xlu0 %1704
    %1706 = vrot.lane.b32.xlu0 %v1689, 127
    %v1707 = vpop.permute.xlu0 %1706
    %v1708 = vsel %vm58, %v1697, %v1699
    %v1709 = vsel %vm58, %v1699, %v1701
    %v1710 = vsel %vm58, %v1703, %v1705
    %v1711 = vsel %vm58, %v1705, %v1707
    %1716 = vrot.lane.b32.xlu0 %v1684, 126
    %v1717 = vpop.permute.xlu0 %1716
    %1718 = vrot.lane.b32.xlu0 %v1685, 126
    %v1719 = vpop.permute.xlu0 %1718
    %1720 = vrot.lane.b32.xlu0 %v1688, 126
    %v1721 = vpop.permute.xlu0 %1720
    %1722 = vrot.lane.b32.xlu0 %v1686, 126
    %v1723 = vpop.permute.xlu0 %1722
    %1724 = vrot.lane.b32.xlu0 %v1687, 126
    %v1725 = vpop.permute.xlu0 %1724
    %1726 = vrot.lane.b32.xlu0 %v1689, 126
    %v1727 = vpop.permute.xlu0 %1726
    %v1728 = vsel %vm134, %v1717, %v1719
    %v1729 = vsel %vm134, %v1719, %v1721
    %v1730 = vsel %vm134, %v1723, %v1725
    %v1731 = vsel %vm134, %v1725, %v1727
    %v1736 = vpack.c.bf16 %v1686, %v1684
    %v1737 = vpack.c.bf16 %v1687, %v1685
    %v1738 = vpack.c.bf16 %v1710, %v1708
    %v1739 = vpack.c.bf16 %v1711, %v1709
    %v1740 = vpack.c.bf16 %v1730, %v1728
    %v1741 = vpack.c.bf16 %v1731, %v1729
    %1742 = vmatpush.bf16.msra.mxu0 0
    %1743 = vmatpush.bf16.msra.mxu0 0
    %1744 = vmatpush.bf16.msra.mxu0 0
    %1745 = vmatpush.bf16.msra.mxu0 0
    %1746 = vmatpush.bf16.msra.mxu0 0
    %1747 = vmatpush.bf16.msra.mxu0 %v1740
    %1748 = vmatpush.bf16.msra.mxu0 %v1738
    %1749 = vmatpush.bf16.msra.mxu0 %v1736
    %1750 = vmatmul.bf16.gmra.mxu0 %v1646
    %v1751 = vpop.f32.mrf.mxu0
    %v1752 = vadd.f32 %v1643, %v1751
    %v1753 = vpop.f32.mrf.mxu0
    %1754 = vdwg.mxu0
    %1755 = vmatpush.bf16.msra.mxu0 0
    %1756 = vmatpush.bf16.msra.mxu0 0
    %1757 = vmatpush.bf16.msra.mxu0 0
    %1758 = vmatpush.bf16.msra.mxu0 0
    %1759 = vmatpush.bf16.msra.mxu0 0
    %1760 = vmatpush.bf16.msra.mxu0 %v1741
    %1761 = vmatpush.bf16.msra.mxu0 %v1739
    %1762 = vmatpush.bf16.msra.mxu0 %v1737
    %1763 = vmatmul.bf16.gmra.mxu0 %v1646
    %v1764 = vpop.f32.mrf.mxu0
    %v1765 = vadd.f32 %v1643, %v1764
    %v1766 = vpop.f32.mrf.mxu0
    %1767 = vdwg.mxu0
    %v1770 = vrot.slane %v1765, 7
    %v1771 = vsel %vm271, %v1752, %v1770
    %s1773 = scalar_lea.vmem [#allocation7], 2
    %1774 = vst.msk [vmem:[%s1773] sm:$0x3] %vm1682, %v1771
    // Predicated region
    $region54: #{tpu_custom_call.1} parent=1 // pred_check
      _
    $region55: #{tpu_custom_call.1} parent=1 // pred_check_branch
      %1776 = sbr.rel (0) target = $region57
    $region56: #{tpu_custom_call.1} parent=1 // pred_region
      %1778 = vsyncadd [#allocation8], 0
      %s1779 = sshll.u32 [#allocation7], 4
      %s1780 = int_to_ptr.vmem [resolvable:$true] %s1779
      %s1781 = sshll.u32 %s13, 4
      %s1782 = int_to_ptr.hbm [resolvable:$true] %s1781
      %1787 = dma.vmem_to_hbm [thread:$0]  %s1780, 64, %s1782, [#allocation8], 32, 32, 2
    $region57: #{tpu_custom_call.1} parent=1 // pred_fallthru
      _
    // Predicated region
    $region58: #{tpu_custom_call.1} parent=1 // pred_check
      _
    $region59: #{tpu_custom_call.1} parent=1 // pred_check_branch
      %1789 = sbr.rel (0) target = $region61
    $region60: #{tpu_custom_call.1} parent=1 // pred_region
      %1791 = vsyncadd [#allocation10], 0
      %s1793 = sshll.u32 [#allocation9], 4
      %s1794 = int_to_ptr.vmem [resolvable:$true] %s1793
      %s1795 = sshll.u32 %s14, 4
      %s1796 = int_to_ptr.hbm [resolvable:$true] %s1795
      %1798 = dma.vmem_to_hbm [thread:$0]  %s1794, 32, %s1796, [#allocation10]
    $region61: #{tpu_custom_call.1} parent=1 // pred_fallthru
      _
    // Predicated region
    $region62: #{tpu_custom_call.1} parent=1 // pred_check
      _
    $region63: #{tpu_custom_call.1} parent=1 // pred_check_branch
      %1800 = sbr.rel (0) target = $region65
    $region64: #{tpu_custom_call.1} parent=1 // pred_region
      %1802 = dma.done [#allocation8], 64
    $region65: #{tpu_custom_call.1} parent=1 // pred_fallthru
      _
    // Predicated region
    $region66: #{tpu_custom_call.1} parent=1 // pred_check
      _
    $region67: #{tpu_custom_call.1} parent=1 // pred_check_branch
      %1804 = sbr.rel (0) target = $region69
    $region68: #{tpu_custom_call.1} parent=1 // pred_region
      %1806 = dma.done [#allocation10], 32
    $region69: #{tpu_custom_call.1} parent=1 // pred_fallthru
      _
    %1807 = vsyncpa [#allocation8], 1
    %1808 = vsyncpa [#allocation10], 1

</llo_original>
